<compile_context>
chip_gen: v5e
topology: v5e:2x2
jax: 0.10.0
libtpu: 0.0.40
codegen_flags: <defaults>
</compile_context>

<pallas_src>
import functools

import jax
import jax.numpy as jnp
from jax.experimental import pallas as pl
from jax.experimental.pallas import tpu as pltpu

EPS = 1e-5          # PyTorch BatchNorm2d default
_LANE = 128
_SUB = 8


def _round_up(x, m):
    return (x + m - 1) // m * m


def _vmem_limit_bytes():
    # v7x: 64 MiB/TC -> stay well under; v5e/v6e: 128 MiB physical -> can go higher.
    try:
        cap = pltpu.get_tpu_info().vmem_capacity_bytes
        return int(min(cap * 3 // 4, 100 * 1024 * 1024))
    except Exception:
        return 48 * 1024 * 1024


def _tap_rows(x_ref, off, rows, stride):
    """Rows for one conv tap: contiguous (stride==1) or strided slice of the slab."""
    if stride == 1:
        return x_ref[off:off + rows, :]
    return x_ref[pl.ds(off, rows, stride=stride), :]


def _conv_wide(x_ref, w_ref, *, k, c, stride, wp, rows):
    """Width-extended conv tile: sum over k*k row-shifted slices @ per-tap weights."""
    acc = jnp.zeros((rows, w_ref.shape[1]), jnp.float32)
    for t in range(k * k):          # static loop; TODO(synk): K grid axis for huge C*k*k
        off = (t // k) * wp + (t % k)
        lhs = _tap_rows(x_ref, off, rows, stride)
        acc += jnp.dot(lhs, w_ref[t * c:(t + 1) * c, :],
                       preferred_element_type=jnp.float32)
    return acc


# ----------------------------- Pallas kernels ------------------------------

def _conv_stats_kernel(x_ref, w_ref, mask_ref, stats_ref, *, k, c, stride, wp, rows):
    """Pass 1: per-image partial BN statistics of the (masked) conv output.

    x: (Lp, C) flattened padded image   w: (k*k*C, Ftile)   mask: (rows, 1) {0,1}
    stats: (8, Ftile)  row0 = sum over valid positions, row1 = sum of squares.
    """
    conv = _conv_wide(x_ref, w_ref, k=k, c=c, stride=stride, wp=wp, rows=rows)
    m = mask_ref[...]                                     # zero out garbage cols / pad rows
    s0 = jnp.sum(conv * m, axis=0, keepdims=True)
    s1 = jnp.sum(conv * conv * m, axis=0, keepdims=True)
    zeros = jnp.zeros((6, conv.shape[1]), jnp.float32)
    stats_ref[...] = jnp.concatenate([s0, s1, zeros], axis=0)   # single unmasked store


def _conv_norm_kernel(x_ref, w_ref, shift_ref, out_ref, *, k, c, stride, wp, rows):
    """Pass 2: recompute conv with BN-scale folded into the weights, add shift."""
    conv = _conv_wide(x_ref, w_ref, k=k, c=c, stride=stride, wp=wp, rows=rows)
    out_ref[...] = (conv + shift_ref[...]).astype(out_ref.dtype)


# ------------------------------ host wrapper -------------------------------

def conv2d_batchnorm(x, weight, bias, gamma, beta, *, stride, padding,
                     compute_dtype=jnp.float32, tf=512, out_layout="NCHW"):
    """Forward of conv2DBatchNorm (training-mode / batch-statistics BN).

    x:      (N, C, H, W) f32      weight: (F, C, k, k) f32 (PyTorch OIHW)
    bias:   (F,)  -- cancels exactly against the batch mean (batch-stats BN only)
    gamma, beta: (F,) BN affine.  Returns (N, F, OH, OW) f32 (or NHWC if requested).
    """
    del bias  # (conv + b) - mean(conv + b) == conv - mean(conv). NOT valid for eval-mode BN.

    n, c, h, w = x.shape
    f, _, k, _ = weight.shape

    oh = (h + 2 * padding - k) // stride + 1
    ow = (w + 2 * padding - k) // stride + 1
    hp, wp = h + 2 * padding, w + 2 * padding

    # "Width-extended" output rows per image: q = oh_idx * Wp + j, j in [0, Wp).
    # Columns j >= OW are garbage (masked out of stats, sliced off at the end).
    mimg = oh * wp
    mp = _round_up(mimg, _SUB)
    halo = (k - 1) * wp + (k - 1)
    lp = max(_round_up(stride * (mp - 1) + halo + 1, _SUB), hp * wp)

    fp = _round_up(f, _LANE)
    tf = max(_LANE, min(_round_up(tf, _LANE), fp))
    while fp % tf:
        tf -= _LANE
    gf = fp // tf

    # Layout glue (~1x input bytes, no k^2 inflation): NCHW -> padded NHWC -> flat slab.
    x_nhwc = jnp.transpose(x, (0, 2, 3, 1))
    x_pad = jnp.pad(x_nhwc, ((0, 0), (padding, padding), (padding, padding), (0, 0)))
    xflat = jnp.pad(x_pad.reshape(n, hp * wp, c),
                    ((0, 0), (0, lp - hp * wp), (0, 0))).astype(compute_dtype)

    # Per-tap weights: rows [t*C:(t+1)*C] hold w[:, :, ki, kj].T with t = ki*k + kj.
    w_taps = jnp.transpose(weight, (2, 3, 1, 0)).reshape(k * k * c, f).astype(jnp.float32)
    w_pad = jnp.pad(w_taps, ((0, 0), (0, fp - f)))                 # (k*k*C, Fp) f32
    w1 = w_pad.astype(compute_dtype)

    # Valid-position mask over the width-extended rows.
    qi = jnp.arange(mp)
    mask = ((qi < mimg) & ((qi % wp) < ow)).astype(jnp.float32).reshape(mp, 1)

    cparams = pltpu.CompilerParams(
        dimension_semantics=("parallel", "parallel"),   # N x F-tiles; megacore-shardable
        vmem_limit_bytes=_vmem_limit_bytes(),
    )

    static = dict(k=k, c=c, stride=stride, wp=wp, rows=mp)

    # ---- pass 1: per-image partial (sum, sumsq) of the conv output ----------
    stats = pl.pallas_call(
        functools.partial(_conv_stats_kernel, **static),
        out_shape=jax.ShapeDtypeStruct((n * 8, fp), jnp.float32),
        grid=(n, gf),
        in_specs=[
            pl.BlockSpec((None, lp, c), lambda i, j: (i, 0, 0)),   # image stays resident over j
            pl.BlockSpec((k * k * c, tf), lambda i, j: (0, j)),
            pl.BlockSpec((mp, 1), lambda i, j: (0, 0)),
        ],
        out_specs=pl.BlockSpec((8, tf), lambda i, j: (i, j)),
        compiler_params=cparams,
    )(xflat, w1, mask)

    # ---- O(N*F) glue: fold BN into per-channel (scale folded into W, shift) ---
    stats = stats.reshape(n, 8, fp)
    cnt = float(n * oh * ow)
    ssum = jnp.sum(stats[:, 0, :], axis=0)
    ssq = jnp.sum(stats[:, 1, :], axis=0)
    mean = ssum / cnt
    # TODO(synk): Welford-style partials would avoid E[x^2]-mean^2 cancellation for
    # extreme |mean|/std ratios; the clamp only guards against tiny negatives.
    var = jnp.maximum(ssq / cnt - mean * mean, 0.0)
    gamma_p = jnp.pad(gamma.astype(jnp.float32), (0, fp - f))
    beta_p = jnp.pad(beta.astype(jnp.float32), (0, fp - f))
    scale = gamma_p * jax.lax.rsqrt(var + EPS)                     # (Fp,)
    shift = (beta_p - mean * scale).reshape(1, fp)                 # (1, Fp)
    w2 = (w_pad * scale[None, :]).astype(compute_dtype)            # scale folded (f32 fold)

    # ---- pass 2: recompute conv (compact input re-read), add shift, store ----
    out_wide = pl.pallas_call(
        functools.partial(_conv_norm_kernel, **static),
        out_shape=jax.ShapeDtypeStruct((n * mp, fp), jnp.float32),
        grid=(n, gf),
        in_specs=[
            pl.BlockSpec((None, lp, c), lambda i, j: (i, 0, 0)),
            pl.BlockSpec((k * k * c, tf), lambda i, j: (0, j)),
            pl.BlockSpec((1, tf), lambda i, j: (0, j)),
        ],
        out_specs=pl.BlockSpec((mp, tf), lambda i, j: (i, j)),     # lane-dense stores
        compiler_params=cparams,
    )(xflat, w2, shift)

    # Drop padded rows / garbage columns / channel padding.
    out = out_wide.reshape(n, mp, fp)[:, :mimg, :f].reshape(n, oh, wp, f)[:, :, :ow, :]
    if out_layout == "NHWC":
        return out                       # skips the extra XLA transpose round-trip
    return jnp.transpose(out, (0, 3, 1, 2))


# ------------------------------- reference ---------------------------------

def _reference(x, weight, bias, gamma, beta, *, stride, padding):
    """Pure-JAX reference: conv (+bias) + training-mode batch norm (f32-accurate)."""
    conv = jax.lax.conv_general_dilated(
        x, weight, window_strides=(stride, stride),
        padding=[(padding, padding), (padding, padding)],
        dimension_numbers=("NCHW", "OIHW", "NCHW"),
        precision=jax.lax.Precision.HIGHEST,
    ) + bias.reshape(1, -1, 1, 1)
    mean = jnp.mean(conv, axis=(0, 2, 3), keepdims=True)
    var = jnp.mean((conv - mean) ** 2, axis=(0, 2, 3), keepdims=True)
    return (conv - mean) / jnp.sqrt(var + EPS) * gamma.reshape(1, -1, 1, 1) + \
        beta.reshape(1, -1, 1, 1)


if __name__ == "__main__":
    # conv2DBatchNorm(in_channels=4, n_filters=8, k_size=3, stride=1, padding=1, bias=True)
    N, C, H, W = 2, 4, 16, 16
    F, K, STRIDE, PAD = 8, 3, 1, 1

    key = jax.random.PRNGKey(0)
    kx, kw, kb, kg, kbt = jax.random.split(key, 5)
    x = jax.random.normal(kx, (N, C, H, W), dtype=jnp.float32)
    weight = jax.random.normal(kw, (F, C, K, K), dtype=jnp.float32) * 0.1
    bias = jax.random.normal(kb, (F,), dtype=jnp.float32) * 0.1
    gamma = 1.0 + 0.1 * jax.random.normal(kg, (F,), dtype=jnp.float32)
    beta = 0.1 * jax.random.normal(kbt, (F,), dtype=jnp.float32)

    ref = _reference(x, weight, bias, gamma, beta, stride=STRIDE, padding=PAD)

    # f32 MXU-operand path.  (Reference keeps the conv bias; the kernel drops it and
    # must still match -> validates the exact batch-stats cancellation.)
    out32 = conv2d_batchnorm(x, weight, bias, gamma, beta, stride=STRIDE,
                             padding=PAD, compute_dtype=jnp.float32)
    out32 = jax.block_until_ready(out32)
    assert out32.shape == (N, F, H, W)
    # Tolerance leaves headroom for multi-pass MXU f32 matmul rounding.
    assert jnp.allclose(out32, ref, atol=5e-3, rtol=5e-3), "f32 mismatch vs reference"

    # bf16 MXU-operand fast path (valid on v5e/v6e/v7x); f32 accumulation & BN math.
    out16 = conv2d_batchnorm(x, weight, bias, gamma, beta, stride=STRIDE,
                             padding=PAD, compute_dtype=jnp.bfloat16)
    out16 = jax.block_until_ready(out16)
    assert jnp.allclose(out16, ref, atol=8e-2, rtol=5e-2), "bf16 mismatch vs reference"

    print("KERNEL_OK")
</pallas_src>

<mosaic_0001>
module attributes {stable_mosaic.version = 11 : i64} {
  func.func @_conv_stats_kernel(%arg0: i32, %arg1: i32, %arg2: memref<1x328x4xf32, #tpu.memory_space<vmem>>, %arg3: memref<36x128xf32, #tpu.memory_space<vmem>>, %arg4: memref<288x1xf32, #tpu.memory_space<vmem>>, %arg5: memref<8x128xf32, #tpu.memory_space<vmem>>) attributes {dimension_semantics = [#tpu.dimension_semantics<parallel>, #tpu.dimension_semantics<parallel>], iteration_bounds = array<i64: 2, 1>, scalar_prefetch = 0 : i64, scratch_operands = 0 : i64, tpu.core_type = #tpu.core_type<tc>, window_params = [{transform_indices = @transform_0, window_bounds = array<i64: 1, 328, 4>}, {transform_indices = @transform_1, window_bounds = array<i64: 36, 128>}, {pipeline_mode = #tpu.pipeline_mode<synchronous>, transform_indices = @transform_2, window_bounds = array<i64: 288, 1>}, {transform_indices = @transform_3, window_bounds = array<i64: 8, 128>}]} {
    %cst = arith.constant 0.000000e+00 : f32
    %0 = vector.broadcast %cst : f32 to vector<288x128xf32>
    %c0 = arith.constant 0 : index
    %c0_0 = arith.constant 0 : index
    %c0_1 = arith.constant 0 : index
    %1 = vector.load %arg2[%c0, %c0_0, %c0_1] : memref<1x328x4xf32, #tpu.memory_space<vmem>>, vector<1x288x4xf32>
    %2 = vector.shape_cast %1 : vector<1x288x4xf32> to vector<288x4xf32>
    %c0_2 = arith.constant 0 : index
    %c0_3 = arith.constant 0 : index
    %3 = vector.load %arg3[%c0_2, %c0_3] : memref<36x128xf32, #tpu.memory_space<vmem>>, vector<4x128xf32>
    %cst_4 = arith.constant dense<0.000000e+00> : vector<288x128xf32>
    %4 = tpu.matmul %2, %3, %cst_4 {dimension_numbers = #tpu.dot_dimension_numbers<[1], [0], [0], [1], [0, 0, 1, 1], [], []>} : vector<288x4xf32>, vector<4x128xf32>, vector<288x128xf32> -> vector<288x128xf32>
    %5 = arith.addf %0, %4 : vector<288x128xf32>
    %c0_5 = arith.constant 0 : index
    %c1 = arith.constant 1 : index
    %c0_6 = arith.constant 0 : index
    %6 = vector.load %arg2[%c0_5, %c1, %c0_6] : memref<1x328x4xf32, #tpu.memory_space<vmem>>, vector<1x288x4xf32>
    %7 = vector.shape_cast %6 : vector<1x288x4xf32> to vector<288x4xf32>
    %c4 = arith.constant 4 : index
    %c0_7 = arith.constant 0 : index
    %8 = vector.load %arg3[%c4, %c0_7] : memref<36x128xf32, #tpu.memory_space<vmem>>, vector<4x128xf32>
    %cst_8 = arith.constant dense<0.000000e+00> : vector<288x128xf32>
    %9 = tpu.matmul %7, %8, %cst_8 {dimension_numbers = #tpu.dot_dimension_numbers<[1], [0], [0], [1], [0, 0, 1, 1], [], []>} : vector<288x4xf32>, vector<4x128xf32>, vector<288x128xf32> -> vector<288x128xf32>
    %10 = arith.addf %5, %9 : vector<288x128xf32>
    %c0_9 = arith.constant 0 : index
    %c2 = arith.constant 2 : index
    %c0_10 = arith.constant 0 : index
    %11 = vector.load %arg2[%c0_9, %c2, %c0_10] : memref<1x328x4xf32, #tpu.memory_space<vmem>>, vector<1x288x4xf32>
    %12 = vector.shape_cast %11 : vector<1x288x4xf32> to vector<288x4xf32>
    %c8 = arith.constant 8 : index
    %c0_11 = arith.constant 0 : index
    %13 = vector.load %arg3[%c8, %c0_11] : memref<36x128xf32, #tpu.memory_space<vmem>>, vector<4x128xf32>
    %cst_12 = arith.constant dense<0.000000e+00> : vector<288x128xf32>
    %14 = tpu.matmul %12, %13, %cst_12 {dimension_numbers = #tpu.dot_dimension_numbers<[1], [0], [0], [1], [0, 0, 1, 1], [], []>} : vector<288x4xf32>, vector<4x128xf32>, vector<288x128xf32> -> vector<288x128xf32>
    %15 = arith.addf %10, %14 : vector<288x128xf32>
    %c0_13 = arith.constant 0 : index
    %c18 = arith.constant 18 : index
    %c0_14 = arith.constant 0 : index
    %16 = vector.load %arg2[%c0_13, %c18, %c0_14] : memref<1x328x4xf32, #tpu.memory_space<vmem>>, vector<1x288x4xf32>
    %17 = vector.shape_cast %16 : vector<1x288x4xf32> to vector<288x4xf32>
    %c12 = arith.constant 12 : index
    %c0_15 = arith.constant 0 : index
    %18 = vector.load %arg3[%c12, %c0_15] : memref<36x128xf32, #tpu.memory_space<vmem>>, vector<4x128xf32>
    %cst_16 = arith.constant dense<0.000000e+00> : vector<288x128xf32>
    %19 = tpu.matmul %17, %18, %cst_16 {dimension_numbers = #tpu.dot_dimension_numbers<[1], [0], [0], [1], [0, 0, 1, 1], [], []>} : vector<288x4xf32>, vector<4x128xf32>, vector<288x128xf32> -> vector<288x128xf32>
    %20 = arith.addf %15, %19 : vector<288x128xf32>
    %c0_17 = arith.constant 0 : index
    %c19 = arith.constant 19 : index
    %c0_18 = arith.constant 0 : index
    %21 = vector.load %arg2[%c0_17, %c19, %c0_18] : memref<1x328x4xf32, #tpu.memory_space<vmem>>, vector<1x288x4xf32>
    %22 = vector.shape_cast %21 : vector<1x288x4xf32> to vector<288x4xf32>
    %c16 = arith.constant 16 : index
    %c0_19 = arith.constant 0 : index
    %23 = vector.load %arg3[%c16, %c0_19] : memref<36x128xf32, #tpu.memory_space<vmem>>, vector<4x128xf32>
    %cst_20 = arith.constant dense<0.000000e+00> : vector<288x128xf32>
    %24 = tpu.matmul %22, %23, %cst_20 {dimension_numbers = #tpu.dot_dimension_numbers<[1], [0], [0], [1], [0, 0, 1, 1], [], []>} : vector<288x4xf32>, vector<4x128xf32>, vector<288x128xf32> -> vector<288x128xf32>
    %25 = arith.addf %20, %24 : vector<288x128xf32>
    %c0_21 = arith.constant 0 : index
    %c20 = arith.constant 20 : index
    %c0_22 = arith.constant 0 : index
    %26 = vector.load %arg2[%c0_21, %c20, %c0_22] : memref<1x328x4xf32, #tpu.memory_space<vmem>>, vector<1x288x4xf32>
    %27 = vector.shape_cast %26 : vector<1x288x4xf32> to vector<288x4xf32>
    %c20_23 = arith.constant 20 : index
    %c0_24 = arith.constant 0 : index
    %28 = vector.load %arg3[%c20_23, %c0_24] : memref<36x128xf32, #tpu.memory_space<vmem>>, vector<4x128xf32>
    %cst_25 = arith.constant dense<0.000000e+00> : vector<288x128xf32>
    %29 = tpu.matmul %27, %28, %cst_25 {dimension_numbers = #tpu.dot_dimension_numbers<[1], [0], [0], [1], [0, 0, 1, 1], [], []>} : vector<288x4xf32>, vector<4x128xf32>, vector<288x128xf32> -> vector<288x128xf32>
    %30 = arith.addf %25, %29 : vector<288x128xf32>
    %c0_26 = arith.constant 0 : index
    %c36 = arith.constant 36 : index
    %c0_27 = arith.constant 0 : index
    %31 = vector.load %arg2[%c0_26, %c36, %c0_27] : memref<1x328x4xf32, #tpu.memory_space<vmem>>, vector<1x288x4xf32>
    %32 = vector.shape_cast %31 : vector<1x288x4xf32> to vector<288x4xf32>
    %c24 = arith.constant 24 : index
    %c0_28 = arith.constant 0 : index
    %33 = vector.load %arg3[%c24, %c0_28] : memref<36x128xf32, #tpu.memory_space<vmem>>, vector<4x128xf32>
    %cst_29 = arith.constant dense<0.000000e+00> : vector<288x128xf32>
    %34 = tpu.matmul %32, %33, %cst_29 {dimension_numbers = #tpu.dot_dimension_numbers<[1], [0], [0], [1], [0, 0, 1, 1], [], []>} : vector<288x4xf32>, vector<4x128xf32>, vector<288x128xf32> -> vector<288x128xf32>
    %35 = arith.addf %30, %34 : vector<288x128xf32>
    %c0_30 = arith.constant 0 : index
    %c37 = arith.constant 37 : index
    %c0_31 = arith.constant 0 : index
    %36 = vector.load %arg2[%c0_30, %c37, %c0_31] : memref<1x328x4xf32, #tpu.memory_space<vmem>>, vector<1x288x4xf32>
    %37 = vector.shape_cast %36 : vector<1x288x4xf32> to vector<288x4xf32>
    %c28 = arith.constant 28 : index
    %c0_32 = arith.constant 0 : index
    %38 = vector.load %arg3[%c28, %c0_32] : memref<36x128xf32, #tpu.memory_space<vmem>>, vector<4x128xf32>
    %cst_33 = arith.constant dense<0.000000e+00> : vector<288x128xf32>
    %39 = tpu.matmul %37, %38, %cst_33 {dimension_numbers = #tpu.dot_dimension_numbers<[1], [0], [0], [1], [0, 0, 1, 1], [], []>} : vector<288x4xf32>, vector<4x128xf32>, vector<288x128xf32> -> vector<288x128xf32>
    %40 = arith.addf %35, %39 : vector<288x128xf32>
    %c0_34 = arith.constant 0 : index
    %c38 = arith.constant 38 : index
    %c0_35 = arith.constant 0 : index
    %41 = vector.load %arg2[%c0_34, %c38, %c0_35] : memref<1x328x4xf32, #tpu.memory_space<vmem>>, vector<1x288x4xf32>
    %42 = vector.shape_cast %41 : vector<1x288x4xf32> to vector<288x4xf32>
    %c32 = arith.constant 32 : index
    %c0_36 = arith.constant 0 : index
    %43 = vector.load %arg3[%c32, %c0_36] : memref<36x128xf32, #tpu.memory_space<vmem>>, vector<4x128xf32>
    %cst_37 = arith.constant dense<0.000000e+00> : vector<288x128xf32>
    %44 = tpu.matmul %42, %43, %cst_37 {dimension_numbers = #tpu.dot_dimension_numbers<[1], [0], [0], [1], [0, 0, 1, 1], [], []>} : vector<288x4xf32>, vector<4x128xf32>, vector<288x128xf32> -> vector<288x128xf32>
    %45 = arith.addf %40, %44 : vector<288x128xf32>
    %c0_38 = arith.constant 0 : index
    %c0_39 = arith.constant 0 : index
    %46 = vector.load %arg4[%c0_38, %c0_39] : memref<288x1xf32, #tpu.memory_space<vmem>>, vector<288x1xf32>
    %47 = vector.broadcast %46 : vector<288x1xf32> to vector<288x128xf32>
    %48 = arith.mulf %45, %47 : vector<288x128xf32>
    %cst_40 = arith.constant dense<0.000000e+00> : vector<128xf32>
    %49 = vector.multi_reduction <add>, %48, %cst_40 [0] : vector<288x128xf32> to vector<128xf32>
    %50 = vector.shape_cast %49 : vector<128xf32> to vector<1x128xf32>
    %51 = arith.mulf %45, %45 : vector<288x128xf32>
    %52 = vector.broadcast %46 : vector<288x1xf32> to vector<288x128xf32>
    %53 = arith.mulf %51, %52 : vector<288x128xf32>
    %cst_41 = arith.constant dense<0.000000e+00> : vector<128xf32>
    %54 = vector.multi_reduction <add>, %53, %cst_41 [0] : vector<288x128xf32> to vector<128xf32>
    %55 = vector.shape_cast %54 : vector<128xf32> to vector<1x128xf32>
    %cst_42 = arith.constant 0.000000e+00 : f32
    %56 = vector.broadcast %cst_42 : f32 to vector<6x128xf32>
    %57 = tpu.concatenate %50, %55, %56 in 0 : vector<1x128xf32>, vector<1x128xf32>, vector<6x128xf32> -> vector<8x128xf32>
    %c0_43 = arith.constant 0 : index
    %c0_44 = arith.constant 0 : index
    %58 = vector.load %arg5[%c0_43, %c0_44] : memref<8x128xf32, #tpu.memory_space<vmem>>, vector<8x128xf32>
    tpu.vector_store %arg5[%c0_43, %c0_44], %57 {strides = array<i32>} : memref<8x128xf32, #tpu.memory_space<vmem>>, vector<8x128xf32>,
    return
  }
  func.func @transform_0(%arg0: i32, %arg1: i32) -> (i32, i32, i32) {
    %c0_i32 = arith.constant 0 : i32
    %c0_i32_0 = arith.constant 0 : i32
    %c0_i32_1 = arith.constant 0 : i32
    return %arg0, %c0_i32, %c0_i32_0 : i32, i32, i32
  }
  func.func @transform_1(%arg0: i32, %arg1: i32) -> (i32, i32) {
    %c0_i32 = arith.constant 0 : i32
    %c0_i32_0 = arith.constant 0 : i32
    return %c0_i32, %arg1 : i32, i32
  }
  func.func @transform_2(%arg0: i32, %arg1: i32) -> (i32, i32) {
    %c0_i32 = arith.constant 0 : i32
    %c0_i32_0 = arith.constant 0 : i32
    %c0_i32_1 = arith.constant 0 : i32
    return %c0_i32, %c0_i32_0 : i32, i32
  }
  func.func @transform_3(%arg0: i32, %arg1: i32) -> (i32, i32) {
    %c0_i32 = arith.constant 0 : i32
    return %arg0, %arg1 : i32, i32
  }
}

</mosaic_0001>

<llo_original>
// kernel: tpu_custom_call.1
$region0: #{tpu_custom_call.1}
  #allocation0 [shape = 'u32[]', space=smem, size = 0x4, offset = 0x4, fixed_abs, tag = 'smem constant byte address 0x4 - core index']
  #allocation1 [shape = 'u32[72,128]{1,0:T(1,128)}', space=vmem, size = 0x9000, scoped, tag = 'internal scratch']
  %s0 = inlined_call_operand.vmem [shape: f32[2,328,4], index: 0, kind: input, shape index: {}]
  %s1 = inlined_call_operand.vmem [shape: f32[36,128], index: 1, kind: input, shape index: {}]
  %s2 = inlined_call_operand.vmem [shape: f32[288,1], index: 2, kind: input, shape index: {}]
  %s3 = inlined_call_operand.hbm [shape: f32[16,128], index: 3, kind: output, shape index: {}]
  %s4 = sld [smem:[#allocation0]]
  $region45: #{tpu_custom_call.1} parent=0
    _
  %s6 = ssub.s32 1, %s4
  %s7 = scalar_select 0, %s6, %s4
  $region1: #{tpu_custom_call.1} parent=0
    #allocation2 [shape = 'u8[8192]{0}', space=vmem, size = 0x2000, scoped, tag = 'output window, operand 0']
    #allocation3 [shape = 's32[2]{0}', space=sflag, size = 0x8, scoped, tag = 'scoped memory for tpu_custom_call.1']
    %8 = vsyncpa [#allocation3], 0
    %s9 = scalar_lea.sflag [#allocation3], 1
    %10 = vsyncpa %s9, 0
    loop: start=0, step=1, limit=4
    $region2: #{tpu_custom_call.1} parent=1 // loop_pre_header
      _
    $region3: #{tpu_custom_call.1} parent=1 // loop_header
      %s12 = sphi 0, %s16
      %p13 = scmp.ge.s32.totalorder %s12, 4
      %s19 = sphi 0, %s31
      %s20 = sphi 0, %s27
      %s21 = sphi 0, %s19
      %s22 = sphi 0, %s20
      %s23 = sphi 0, %s21
      %s24 = sphi 0, %s22
      %s34 = sphi 0, %s36
      %s37 = sphi 0, %s34
      %s38 = sphi 0, %s37
      %s54 = sphi 0, %s38
      %s60 = sphi 0, %s62
      %s63 = sphi 0, %s60
      %s64 = sphi 0, %s63
      %s80 = sphi 0, %s64
      %s84 = sphi 0, %s84
      %s86 = sphi 0, %s84
      %s87 = sphi 0, %s86
      %s101 = sphi 0, %s87
      %s109 = sphi 0, %s111
      %s112 = sphi 0, %s109
      %s113 = sphi 0, %s112
      %s129 = sphi 0, %s113
    $region4: #{tpu_custom_call.1} parent=1 // loop_header_branch
      %15 = sbr.rel (%p13) target = $region8
    $region5: #{tpu_custom_call.1} parent=1 // loop_body
      %s17 = ssub.s32 %s12, 1
      %s18 = ssub.s32 %s12, 2
      %s25 = sadd.s32 1, %s20
      %p26 = scmp.ge.s32.totalorder %s25, 1
      %s27 = scalar_select %p26, 0, %s25
      %s28 = sadd.s32 1, %s19
      %s29 = scalar_select %p26, %s28, %s19
      %p30 = scmp.ge.s32.totalorder %s29, 2
      %s31 = scalar_select %p30, 0, %s29
      %s32 = ssub.s32 %s19, %s31
      %p33 = scmp.eq.s32.totalorder %s32, 0
      %s35 = sadd.s32 %s34, 1
      %s36 = scalar_select %p33, %s34, %s35
      %p39 = pneg %p33
      %p40 = scmp.eq.s32.totalorder %s12, 1
      %p41 = por %p39, %p40
      %p42 = scmp.ne.s32.totalorder %s34, %s37
      %p43 = scmp.eq.s32.totalorder %s12, 0
      %p44 = por %p42, %p43
      %p45 = scmp.ne.s32.totalorder %s34, %s37
      %p46 = scmp.eq.s32.totalorder %s17, 1
      %p47 = por %p45, %p46
      %p48 = scmp.ne.s32.totalorder %s37, %s38
      %p49 = scmp.eq.s32.totalorder %s17, 0
      %p50 = por %p48, %p49
      %p51 = scmp.ne.s32.totalorder %s37, %s38
      %p52 = scmp.eq.s32.totalorder %s18, 1
      %p53 = por %p51, %p52
      %p55 = scmp.ne.s32.totalorder %s38, %s54
      %p56 = scmp.eq.s32.totalorder %s18, 0
      %p57 = por %p55, %p56
      %s58 = ssub.s32 %s20, %s27
      %p59 = scmp.eq.s32.totalorder %s58, 0
      %s61 = sadd.s32 %s60, 1
      %s62 = scalar_select %p59, %s60, %s61
      %p65 = pneg %p59
      %p66 = scmp.eq.s32.totalorder %s12, 1
      %p67 = por %p65, %p66
      %p68 = scmp.ne.s32.totalorder %s60, %s63
      %p69 = scmp.eq.s32.totalorder %s12, 0
      %p70 = por %p68, %p69
      %p71 = scmp.ne.s32.totalorder %s60, %s63
      %p72 = scmp.eq.s32.totalorder %s17, 1
      %p73 = por %p71, %p72
      %p74 = scmp.ne.s32.totalorder %s63, %s64
      %p75 = scmp.eq.s32.totalorder %s17, 0
      %p76 = por %p74, %p75
      %p77 = scmp.ne.s32.totalorder %s63, %s64
      %p78 = scmp.eq.s32.totalorder %s18, 1
      %p79 = por %p77, %p78
      %p81 = scmp.ne.s32.totalorder %s64, %s80
      %p82 = scmp.eq.s32.totalorder %s18, 0
      %p83 = por %p81, %p82
      %s85 = sadd.s32 %s84, 1
      %p88 = scmp.eq.s32.totalorder %s12, 1
      %p89 = scmp.ne.s32.totalorder %s84, %s86
      %p90 = scmp.eq.s32.totalorder %s12, 0
      %p91 = por %p89, %p90
      %p92 = scmp.ne.s32.totalorder %s84, %s86
      %p93 = scmp.eq.s32.totalorder %s17, 1
      %p94 = por %p92, %p93
      %p95 = scmp.ne.s32.totalorder %s86, %s87
      %p96 = scmp.eq.s32.totalorder %s17, 0
      %p97 = por %p95, %p96
      %p98 = scmp.ne.s32.totalorder %s86, %s87
      %p99 = scmp.eq.s32.totalorder %s18, 1
      %p100 = por %p98, %p99
      %p102 = scmp.ne.s32.totalorder %s87, %s101
      %p103 = scmp.eq.s32.totalorder %s18, 0
      %p104 = por %p102, %p103
      %s105 = ssub.s32 %s19, %s31
      %s106 = ssub.s32 %s20, %s27
      %s107 = sor.u32 %s105, %s106
      %p108 = scmp.eq.s32.totalorder %s107, 0
      %s110 = sadd.s32 %s109, 1
      %s111 = scalar_select %p108, %s109, %s110
      %p114 = pneg %p108
      %p115 = scmp.eq.s32.totalorder %s12, 1
      %p116 = por %p114, %p115
      %p117 = scmp.ne.s32.totalorder %s109, %s112
      %p118 = scmp.eq.s32.totalorder %s12, 0
      %p119 = por %p117, %p118
      %p120 = scmp.ne.s32.totalorder %s109, %s112
      %p121 = scmp.eq.s32.totalorder %s17, 1
      %p122 = por %p120, %p121
      %p123 = scmp.ne.s32.totalorder %s112, %s113
      %p124 = scmp.eq.s32.totalorder %s17, 0
      %p125 = por %p123, %p124
      %p126 = scmp.ne.s32.totalorder %s112, %s113
      %p127 = scmp.eq.s32.totalorder %s18, 1
      %p128 = por %p126, %p127
      %p130 = scmp.ne.s32.totalorder %s113, %s129
      %p131 = scmp.eq.s32.totalorder %s18, 0
      %p132 = por %p130, %p131
      %p133 = scmp.le.s32.totalorder 1, %s12
      %p134 = scmp.lt.s32.totalorder %s12, 3
      %p135 = pnand %p133, %p134
      %p136 = pneg %p135
      // Predicated region
      $region9: #{tpu_custom_call.1} parent=5 // pred_check
        _
      $region10: #{tpu_custom_call.1} parent=5 // pred_check_branch
        %138 = sbr.rel (%p135) target = $region12
      $region11: #{tpu_custom_call.1} parent=5 // pred_region
        %s139 = ssub.s32 %s12, 1
        // Predicated region
        $region13: #{tpu_custom_call.1} parent=11 // pred_check
          %p140 = pneg %p76
        $region14: #{tpu_custom_call.1} parent=11 // pred_check_branch
          %142 = sbr.rel (%p140) target = $region16
        $region15: #{tpu_custom_call.1} parent=11 // pred_region
          %p143 = scmp.lt.s32.totalorder %s22, 0
          %s144 = scalar_select %p143, %s22, 0
          %s145 = smul.addr %s144, 8
          %s146 = scalar_lea.vmem %s1, %s145
        $region16: #{tpu_custom_call.1} parent=11 // pred_fallthru
          _
        // Predicated region
        $region17: #{tpu_custom_call.1} parent=11 // pred_check
          %p147 = pneg %p97
        $region18: #{tpu_custom_call.1} parent=11 // pred_check_branch
          %149 = sbr.rel (%p147) target = $region20
        $region19: #{tpu_custom_call.1} parent=11 // pred_region
          _
        $region20: #{tpu_custom_call.1} parent=11 // pred_fallthru
          _
      $region12: #{tpu_custom_call.1} parent=5 // pred_fallthru
        _
      %p150 = scmp.lt.s32.totalorder %s12, 2
      // Predicated region
      $region21: #{tpu_custom_call.1} parent=5 // pred_check
        %p151 = pneg %p150
      $region22: #{tpu_custom_call.1} parent=5 // pred_check_branch
        %153 = sbr.rel (%p151) target = $region24
      $region23: #{tpu_custom_call.1} parent=5 // pred_region
        // Predicated region
        $region25: #{tpu_custom_call.1} parent=23 // pred_check
          %p154 = pneg %p44
        $region26: #{tpu_custom_call.1} parent=23 // pred_check_branch
          %156 = sbr.rel (%p154) target = $region28
        $region27: #{tpu_custom_call.1} parent=23 // pred_region
          %p157 = scmp.lt.s32.totalorder %s19, 1
          %s158 = scalar_select %p157, %s19, 1
          %s159 = smul.addr %s158, 41
          %s160 = smul.addr %s159, 8
          %s161 = scalar_lea.vmem %s0, %s160
        $region28: #{tpu_custom_call.1} parent=23 // pred_fallthru
          _
      $region24: #{tpu_custom_call.1} parent=5 // pred_fallthru
        _
      %p162 = scmp.le.s32.totalorder 1, %s12
      %p163 = scmp.lt.s32.totalorder %s12, 3
      %p164 = pnand %p162, %p163
      %p165 = pneg %p164
      // Predicated region
      $region29: #{tpu_custom_call.1} parent=5 // pred_check
        _
      $region30: #{tpu_custom_call.1} parent=5 // pred_check_branch
        %167 = sbr.rel (%p164) target = $region32
      $region31: #{tpu_custom_call.1} parent=5 // pred_region
        %s168 = ssub.s32 %s12, 1
        %p169 = scmp.lt.s32.totalorder %s21, 1
        %s170 = scalar_select %p169, %s21, 1
        %s171 = smul.addr %s170, 41
        %s172 = smul.addr %s171, 8
        %s173 = scalar_lea.vmem %s0, %s172
        %p174 = pneg %p50
        %p175 = pneg %p47
        %p176 = scmp.lt.s32.totalorder %s22, 0
        %s177 = scalar_select %p176, %s22, 0
        %s178 = smul.addr %s177, 8
        %s179 = scalar_lea.vmem %s1, %s178
        %p180 = pneg %p76
        %p181 = pneg %p73
        %p182 = pneg %p97
        %p183 = pneg %p94
        %p184 = pneg %p125
        %p185 = pneg %p122
        %s186 = sand.u32 %s112, 1
        %s187 = scalar_lea.sflag [#allocation3], %s186
        %s188 = sand.u32 %s112, 1
        %s189 = smul.addr %s188, 8
        %s190 = scalar_lea.vmem [#allocation2], %s189
        %p191 = scmp.lt.s32.totalorder %s21, 1
        %s192 = scalar_select %p191, %s21, 1
        %s193 = smul.addr %s192, 41
        %s194 = smul.addr %s193, 8
        %s195 = scalar_lea.vmem %s0, %s194
        %p196 = scmp.lt.s32.totalorder %s22, 0
        %s197 = scalar_select %p196, %s22, 0
        %s198 = smul.addr %s197, 8
        %s199 = scalar_lea.vmem %s1, %s198
        %v200 = vld [vmem:[%s195] sm:$0xff]
        %v201 = vld [vmem:[%s195 + $0x8] sm:$0xff]
        %v202 = vld [vmem:[%s195 + $0x10] sm:$0xff]
        %v203 = vld [vmem:[%s195 + $0x18] sm:$0xff]
        %v204 = vld [vmem:[%s195 + $0x20] sm:$0xff]
        %v205 = vld [vmem:[%s195 + $0x28] sm:$0xff]
        %v206 = vld [vmem:[%s195 + $0x30] sm:$0xff]
        %v207 = vld [vmem:[%s195 + $0x38] sm:$0xff]
        %v208 = vld [vmem:[%s195 + $0x40] sm:$0xff]
        %v209 = vld [vmem:[%s195 + $0x48] sm:$0xff]
        %v210 = vld [vmem:[%s195 + $0x50] sm:$0xff]
        %v211 = vld [vmem:[%s195 + $0x58] sm:$0xff]
        %v212 = vld [vmem:[%s195 + $0x60] sm:$0xff]
        %v213 = vld [vmem:[%s195 + $0x68] sm:$0xff]
        %v214 = vld [vmem:[%s195 + $0x70] sm:$0xff]
        %v215 = vld [vmem:[%s195 + $0x78] sm:$0xff]
        %v216 = vld [vmem:[%s195 + $0x80] sm:$0xff]
        %v217 = vld [vmem:[%s195 + $0x88] sm:$0xff]
        %v218 = vld [vmem:[%s195 + $0x90] sm:$0xff]
        %v219 = vld [vmem:[%s195 + $0x98] sm:$0xff]
        %v220 = vld [vmem:[%s195 + $0xa0] sm:$0xff]
        %v221 = vld [vmem:[%s195 + $0xa8] sm:$0xff]
        %v222 = vld [vmem:[%s195 + $0xb0] sm:$0xff]
        %v223 = vld [vmem:[%s195 + $0xb8] sm:$0xff]
        %v224 = vld [vmem:[%s195 + $0xc0] sm:$0xff]
        %v225 = vld [vmem:[%s195 + $0xc8] sm:$0xff]
        %v226 = vld [vmem:[%s195 + $0xd0] sm:$0xff]
        %v227 = vld [vmem:[%s195 + $0xd8] sm:$0xff]
        %v228 = vld [vmem:[%s195 + $0xe0] sm:$0xff]
        %v229 = vld [vmem:[%s195 + $0xe8] sm:$0xff]
        %v230 = vld [vmem:[%s195 + $0xf0] sm:$0xff]
        %v231 = vld [vmem:[%s195 + $0xf8] sm:$0xff]
        %v232 = vld [vmem:[%s195 + $0x100] sm:$0xff]
        %v233 = vld [vmem:[%s195 + $0x108] sm:$0xff]
        %v234 = vld [vmem:[%s195 + $0x110] sm:$0xff]
        %v235 = vld [vmem:[%s195 + $0x118] sm:$0xff]
        %v236 = vld [vmem:[%s199] sm:$0xf]
        %v237 = vld [vmem:[%s195 + $0x1] sm:$0xff]
        %v238 = vld [vmem:[%s195 + $0x9] sm:$0xff]
        %v239 = vld [vmem:[%s195 + $0x11] sm:$0xff]
        %v240 = vld [vmem:[%s195 + $0x19] sm:$0xff]
        %v241 = vld [vmem:[%s195 + $0x21] sm:$0xff]
        %v242 = vld [vmem:[%s195 + $0x29] sm:$0xff]
        %v243 = vld [vmem:[%s195 + $0x31] sm:$0xff]
        %v244 = vld [vmem:[%s195 + $0x39] sm:$0xff]
        %v245 = vld [vmem:[%s195 + $0x41] sm:$0xff]
        %v246 = vld [vmem:[%s195 + $0x49] sm:$0xff]
        %v247 = vld [vmem:[%s195 + $0x51] sm:$0xff]
        %v248 = vld [vmem:[%s195 + $0x59] sm:$0xff]
        %v249 = vld [vmem:[%s195 + $0x61] sm:$0xff]
        %v250 = vld [vmem:[%s195 + $0x69] sm:$0xff]
        %v251 = vld [vmem:[%s195 + $0x71] sm:$0xff]
        %v252 = vld [vmem:[%s195 + $0x79] sm:$0xff]
        %v253 = vld [vmem:[%s195 + $0x81] sm:$0xff]
        %v254 = vld [vmem:[%s195 + $0x89] sm:$0xff]
        %v255 = vld [vmem:[%s195 + $0x91] sm:$0xff]
        %v256 = vld [vmem:[%s195 + $0x99] sm:$0xff]
        %v257 = vld [vmem:[%s195 + $0xa1] sm:$0xff]
        %v258 = vld [vmem:[%s195 + $0xa9] sm:$0xff]
        %v259 = vld [vmem:[%s195 + $0xb1] sm:$0xff]
        %v260 = vld [vmem:[%s195 + $0xb9] sm:$0xff]
        %v261 = vld [vmem:[%s195 + $0xc1] sm:$0xff]
        %v262 = vld [vmem:[%s195 + $0xc9] sm:$0xff]
        %v263 = vld [vmem:[%s195 + $0xd1] sm:$0xff]
        %v264 = vld [vmem:[%s195 + $0xd9] sm:$0xff]
        %v265 = vld [vmem:[%s195 + $0xe1] sm:$0xff]
        %v266 = vld [vmem:[%s195 + $0xe9] sm:$0xff]
        %v267 = vld [vmem:[%s195 + $0xf1] sm:$0xff]
        %v268 = vld [vmem:[%s195 + $0xf9] sm:$0xff]
        %v269 = vld [vmem:[%s195 + $0x101] sm:$0xff]
        %v270 = vld [vmem:[%s195 + $0x109] sm:$0xff]
        %v271 = vld [vmem:[%s195 + $0x111] sm:$0xff]
        %v272 = vld [vmem:[%s195 + $0x119] sm:$0xff]
        %v273 = vld [vmem:[%s199 + $0x4] sm:$0xf]
        %vm274 = vcmask 31744
        %v276 = vsel %vm274, %v237, 0
        %v279 = vsel %vm274, %v238, 0
        %v282 = vsel %vm274, %v239, 0
        %v285 = vsel %vm274, %v240, 0
        %v288 = vsel %vm274, %v241, 0
        %v291 = vsel %vm274, %v242, 0
        %v294 = vsel %vm274, %v243, 0
        %v297 = vsel %vm274, %v244, 0
        %v300 = vsel %vm274, %v245, 0
        %v303 = vsel %vm274, %v246, 0
        %v306 = vsel %vm274, %v247, 0
        %v309 = vsel %vm274, %v248, 0
        %v312 = vsel %vm274, %v249, 0
        %v315 = vsel %vm274, %v250, 0
        %v318 = vsel %vm274, %v251, 0
        %v321 = vsel %vm274, %v252, 0
        %v324 = vsel %vm274, %v253, 0
        %v327 = vsel %vm274, %v254, 0
        %v330 = vsel %vm274, %v255, 0
        %v333 = vsel %vm274, %v256, 0
        %v336 = vsel %vm274, %v257, 0
        %v339 = vsel %vm274, %v258, 0
        %v342 = vsel %vm274, %v259, 0
        %v345 = vsel %vm274, %v260, 0
        %v348 = vsel %vm274, %v261, 0
        %v351 = vsel %vm274, %v262, 0
        %v354 = vsel %vm274, %v263, 0
        %v357 = vsel %vm274, %v264, 0
        %v360 = vsel %vm274, %v265, 0
        %v363 = vsel %vm274, %v266, 0
        %v366 = vsel %vm274, %v267, 0
        %v369 = vsel %vm274, %v268, 0
        %v372 = vsel %vm274, %v269, 0
        %v375 = vsel %vm274, %v270, 0
        %v378 = vsel %vm274, %v271, 0
        %v381 = vsel %vm274, %v272, 0
        %vm383 = vcmask 1043456
        %v385 = vsel %vm383, %v273, 0
        %387 = vmatpush.msra.mxu0 0.0
        %388 = vmatpush.msra.mxu0 0.0
        %389 = vmatpush.msra.mxu0 0.0
        %390 = vmatpush.msra.mxu0 0.0
        %391 = vmatpush.msra.mxu0 0.0
        %392 = vmatpush.msra.mxu0 0.0
        %393 = vmatpush.msra.mxu0 0.0
        %394 = vmatpush.msra.mxu0 0.0
        %395 = vmatpush.msra.mxu0 0.0
        %396 = vmatpush.msra.mxu0 0.0
        %397 = vmatpush.msra.mxu0 0.0
        %398 = vmatpush.msra.mxu0 0.0
        %399 = vmatpush.msra.mxu0 0.0
        %400 = vmatpush.msra.mxu0 0.0
        %401 = vmatpush.msra.mxu0 0.0
        %402 = vmatpush.msra.mxu0 %v385
        %403 = vmatmul.f32.gmra.mxu0 %v276
        %v404 = vpop.f32.mrf.mxu0
        %v405 = vadd.f32 0.0, %v404
        %406 = vmatmul.f32.gmra.mxu0 %v279
        %v407 = vpop.f32.mrf.mxu0
        %v408 = vadd.f32 0.0, %v407
        %409 = vmatmul.f32.gmra.mxu0 %v282
        %v410 = vpop.f32.mrf.mxu0
        %v411 = vadd.f32 0.0, %v410
        %412 = vmatmul.f32.gmra.mxu0 %v285
        %v413 = vpop.f32.mrf.mxu0
        %v414 = vadd.f32 0.0, %v413
        %415 = vmatmul.f32.gmra.mxu0 %v288
        %v416 = vpop.f32.mrf.mxu0
        %v417 = vadd.f32 0.0, %v416
        %418 = vmatmul.f32.gmra.mxu0 %v291
        %v419 = vpop.f32.mrf.mxu0
        %v420 = vadd.f32 0.0, %v419
        %421 = vmatmul.f32.gmra.mxu0 %v294
        %v422 = vpop.f32.mrf.mxu0
        %v423 = vadd.f32 0.0, %v422
        %424 = vmatmul.f32.gmra.mxu0 %v297
        %v425 = vpop.f32.mrf.mxu0
        %v426 = vadd.f32 0.0, %v425
        %427 = vmatmul.f32.gmra.mxu0 %v300
        %v428 = vpop.f32.mrf.mxu0
        %v429 = vadd.f32 0.0, %v428
        %430 = vmatmul.f32.gmra.mxu0 %v303
        %v431 = vpop.f32.mrf.mxu0
        %v432 = vadd.f32 0.0, %v431
        %433 = vmatmul.f32.gmra.mxu0 %v306
        %v434 = vpop.f32.mrf.mxu0
        %v435 = vadd.f32 0.0, %v434
        %436 = vmatmul.f32.gmra.mxu0 %v309
        %v437 = vpop.f32.mrf.mxu0
        %v438 = vadd.f32 0.0, %v437
        %439 = vmatmul.f32.gmra.mxu0 %v312
        %v440 = vpop.f32.mrf.mxu0
        %v441 = vadd.f32 0.0, %v440
        %442 = vmatmul.f32.gmra.mxu0 %v315
        %v443 = vpop.f32.mrf.mxu0
        %v444 = vadd.f32 0.0, %v443
        %445 = vmatmul.f32.gmra.mxu0 %v318
        %v446 = vpop.f32.mrf.mxu0
        %v447 = vadd.f32 0.0, %v446
        %448 = vmatmul.f32.gmra.mxu0 %v321
        %v449 = vpop.f32.mrf.mxu0
        %v450 = vadd.f32 0.0, %v449
        %451 = vmatmul.f32.gmra.mxu0 %v324
        %v452 = vpop.f32.mrf.mxu0
        %v453 = vadd.f32 0.0, %v452
        %454 = vmatmul.f32.gmra.mxu0 %v327
        %v455 = vpop.f32.mrf.mxu0
        %v456 = vadd.f32 0.0, %v455
        %457 = vmatmul.f32.gmra.mxu0 %v330
        %v458 = vpop.f32.mrf.mxu0
        %v459 = vadd.f32 0.0, %v458
        %460 = vmatmul.f32.gmra.mxu0 %v333
        %v461 = vpop.f32.mrf.mxu0
        %v462 = vadd.f32 0.0, %v461
        %463 = vmatmul.f32.gmra.mxu0 %v336
        %v464 = vpop.f32.mrf.mxu0
        %v465 = vadd.f32 0.0, %v464
        %466 = vmatmul.f32.gmra.mxu0 %v339
        %v467 = vpop.f32.mrf.mxu0
        %v468 = vadd.f32 0.0, %v467
        %469 = vmatmul.f32.gmra.mxu0 %v342
        %v470 = vpop.f32.mrf.mxu0
        %v471 = vadd.f32 0.0, %v470
        %472 = vmatmul.f32.gmra.mxu0 %v345
        %v473 = vpop.f32.mrf.mxu0
        %v474 = vadd.f32 0.0, %v473
        %475 = vmatmul.f32.gmra.mxu0 %v348
        %v476 = vpop.f32.mrf.mxu0
        %v477 = vadd.f32 0.0, %v476
        %478 = vmatmul.f32.gmra.mxu0 %v351
        %v479 = vpop.f32.mrf.mxu0
        %v480 = vadd.f32 0.0, %v479
        %481 = vmatmul.f32.gmra.mxu0 %v354
        %v482 = vpop.f32.mrf.mxu0
        %v483 = vadd.f32 0.0, %v482
        %484 = vmatmul.f32.gmra.mxu0 %v357
        %v485 = vpop.f32.mrf.mxu0
        %v486 = vadd.f32 0.0, %v485
        %487 = vmatmul.f32.gmra.mxu0 %v360
        %v488 = vpop.f32.mrf.mxu0
        %v489 = vadd.f32 0.0, %v488
        %490 = vmatmul.f32.gmra.mxu0 %v363
        %v491 = vpop.f32.mrf.mxu0
        %v492 = vadd.f32 0.0, %v491
        %493 = vmatmul.f32.gmra.mxu0 %v366
        %v494 = vpop.f32.mrf.mxu0
        %v495 = vadd.f32 0.0, %v494
        %496 = vmatmul.f32.gmra.mxu0 %v369
        %v497 = vpop.f32.mrf.mxu0
        %v498 = vadd.f32 0.0, %v497
        %499 = vmatmul.f32.gmra.mxu0 %v372
        %v500 = vpop.f32.mrf.mxu0
        %v501 = vadd.f32 0.0, %v500
        %502 = vmatmul.f32.gmra.mxu0 %v375
        %v503 = vpop.f32.mrf.mxu0
        %v504 = vadd.f32 0.0, %v503
        %505 = vmatmul.f32.gmra.mxu0 %v378
        %v506 = vpop.f32.mrf.mxu0
        %v507 = vadd.f32 0.0, %v506
        %508 = vmatmul.f32.gmra.mxu0 %v381
        %v509 = vpop.f32.mrf.mxu0
        %v510 = vadd.f32 0.0, %v509
        %511 = vdwg.mxu0
        %v513 = vsel %vm274, %v200, 0
        %v516 = vsel %vm274, %v201, 0
        %v519 = vsel %vm274, %v202, 0
        %v522 = vsel %vm274, %v203, 0
        %v525 = vsel %vm274, %v204, 0
        %v528 = vsel %vm274, %v205, 0
        %v531 = vsel %vm274, %v206, 0
        %v534 = vsel %vm274, %v207, 0
        %v537 = vsel %vm274, %v208, 0
        %v540 = vsel %vm274, %v209, 0
        %v543 = vsel %vm274, %v210, 0
        %v546 = vsel %vm274, %v211, 0
        %v549 = vsel %vm274, %v212, 0
        %v552 = vsel %vm274, %v213, 0
        %v555 = vsel %vm274, %v214, 0
        %v558 = vsel %vm274, %v215, 0
        %v561 = vsel %vm274, %v216, 0
        %v564 = vsel %vm274, %v217, 0
        %v567 = vsel %vm274, %v218, 0
        %v570 = vsel %vm274, %v219, 0
        %v573 = vsel %vm274, %v220, 0
        %v576 = vsel %vm274, %v221, 0
        %v579 = vsel %vm274, %v222, 0
        %v582 = vsel %vm274, %v223, 0
        %v585 = vsel %vm274, %v224, 0
        %v588 = vsel %vm274, %v225, 0
        %v591 = vsel %vm274, %v226, 0
        %v594 = vsel %vm274, %v227, 0
        %v597 = vsel %vm274, %v228, 0
        %v600 = vsel %vm274, %v229, 0
        %v603 = vsel %vm274, %v230, 0
        %v606 = vsel %vm274, %v231, 0
        %v609 = vsel %vm274, %v232, 0
        %v612 = vsel %vm274, %v233, 0
        %v615 = vsel %vm274, %v234, 0
        %v618 = vsel %vm274, %v235, 0
        %v621 = vsel %vm383, %v236, 0
        %623 = vmatpush.msra.mxu0 0.0
        %624 = vmatpush.msra.mxu0 0.0
        %625 = vmatpush.msra.mxu0 0.0
        %626 = vmatpush.msra.mxu0 0.0
        %627 = vmatpush.msra.mxu0 0.0
        %628 = vmatpush.msra.mxu0 0.0
        %629 = vmatpush.msra.mxu0 0.0
        %630 = vmatpush.msra.mxu0 0.0
        %631 = vmatpush.msra.mxu0 0.0
        %632 = vmatpush.msra.mxu0 0.0
        %633 = vmatpush.msra.mxu0 0.0
        %634 = vmatpush.msra.mxu0 0.0
        %635 = vmatpush.msra.mxu0 0.0
        %636 = vmatpush.msra.mxu0 0.0
        %637 = vmatpush.msra.mxu0 0.0
        %638 = vmatpush.msra.mxu0 %v621
        %639 = vmatmul.f32.gmra.mxu0 %v513
        %v640 = vpop.f32.mrf.mxu0
        %v641 = vadd.f32 %v405, %v640
        %642 = vmatmul.f32.gmra.mxu0 %v516
        %v643 = vpop.f32.mrf.mxu0
        %v644 = vadd.f32 %v408, %v643
        %645 = vmatmul.f32.gmra.mxu0 %v519
        %v646 = vpop.f32.mrf.mxu0
        %v647 = vadd.f32 %v411, %v646
        %648 = vmatmul.f32.gmra.mxu0 %v522
        %v649 = vpop.f32.mrf.mxu0
        %v650 = vadd.f32 %v414, %v649
        %651 = vmatmul.f32.gmra.mxu0 %v525
        %v652 = vpop.f32.mrf.mxu0
        %v653 = vadd.f32 %v417, %v652
        %654 = vmatmul.f32.gmra.mxu0 %v528
        %v655 = vpop.f32.mrf.mxu0
        %v656 = vadd.f32 %v420, %v655
        %657 = vmatmul.f32.gmra.mxu0 %v531
        %v658 = vpop.f32.mrf.mxu0
        %v659 = vadd.f32 %v423, %v658
        %660 = vmatmul.f32.gmra.mxu0 %v534
        %v661 = vpop.f32.mrf.mxu0
        %v662 = vadd.f32 %v426, %v661
        %663 = vmatmul.f32.gmra.mxu0 %v537
        %v664 = vpop.f32.mrf.mxu0
        %v665 = vadd.f32 %v429, %v664
        %666 = vmatmul.f32.gmra.mxu0 %v540
        %v667 = vpop.f32.mrf.mxu0
        %v668 = vadd.f32 %v432, %v667
        %669 = vmatmul.f32.gmra.mxu0 %v543
        %v670 = vpop.f32.mrf.mxu0
        %v671 = vadd.f32 %v435, %v670
        %672 = vmatmul.f32.gmra.mxu0 %v546
        %v673 = vpop.f32.mrf.mxu0
        %v674 = vadd.f32 %v438, %v673
        %675 = vmatmul.f32.gmra.mxu0 %v549
        %v676 = vpop.f32.mrf.mxu0
        %v677 = vadd.f32 %v441, %v676
        %678 = vmatmul.f32.gmra.mxu0 %v552
        %v679 = vpop.f32.mrf.mxu0
        %v680 = vadd.f32 %v444, %v679
        %681 = vmatmul.f32.gmra.mxu0 %v555
        %v682 = vpop.f32.mrf.mxu0
        %v683 = vadd.f32 %v447, %v682
        %684 = vmatmul.f32.gmra.mxu0 %v558
        %v685 = vpop.f32.mrf.mxu0
        %v686 = vadd.f32 %v450, %v685
        %687 = vmatmul.f32.gmra.mxu0 %v561
        %v688 = vpop.f32.mrf.mxu0
        %v689 = vadd.f32 %v453, %v688
        %690 = vmatmul.f32.gmra.mxu0 %v564
        %v691 = vpop.f32.mrf.mxu0
        %v692 = vadd.f32 %v456, %v691
        %693 = vmatmul.f32.gmra.mxu0 %v567
        %v694 = vpop.f32.mrf.mxu0
        %v695 = vadd.f32 %v459, %v694
        %696 = vmatmul.f32.gmra.mxu0 %v570
        %v697 = vpop.f32.mrf.mxu0
        %v698 = vadd.f32 %v462, %v697
        %699 = vmatmul.f32.gmra.mxu0 %v573
        %v700 = vpop.f32.mrf.mxu0
        %v701 = vadd.f32 %v465, %v700
        %702 = vmatmul.f32.gmra.mxu0 %v576
        %v703 = vpop.f32.mrf.mxu0
        %v704 = vadd.f32 %v468, %v703
        %705 = vmatmul.f32.gmra.mxu0 %v579
        %v706 = vpop.f32.mrf.mxu0
        %v707 = vadd.f32 %v471, %v706
        %708 = vmatmul.f32.gmra.mxu0 %v582
        %v709 = vpop.f32.mrf.mxu0
        %v710 = vadd.f32 %v474, %v709
        %711 = vmatmul.f32.gmra.mxu0 %v585
        %v712 = vpop.f32.mrf.mxu0
        %v713 = vadd.f32 %v477, %v712
        %714 = vmatmul.f32.gmra.mxu0 %v588
        %v715 = vpop.f32.mrf.mxu0
        %v716 = vadd.f32 %v480, %v715
        %717 = vmatmul.f32.gmra.mxu0 %v591
        %v718 = vpop.f32.mrf.mxu0
        %v719 = vadd.f32 %v483, %v718
        %720 = vmatmul.f32.gmra.mxu0 %v594
        %v721 = vpop.f32.mrf.mxu0
        %v722 = vadd.f32 %v486, %v721
        %723 = vmatmul.f32.gmra.mxu0 %v597
        %v724 = vpop.f32.mrf.mxu0
        %v725 = vadd.f32 %v489, %v724
        %726 = vmatmul.f32.gmra.mxu0 %v600
        %v727 = vpop.f32.mrf.mxu0
        %v728 = vadd.f32 %v492, %v727
        %729 = vmatmul.f32.gmra.mxu0 %v603
        %v730 = vpop.f32.mrf.mxu0
        %v731 = vadd.f32 %v495, %v730
        %732 = vmatmul.f32.gmra.mxu0 %v606
        %v733 = vpop.f32.mrf.mxu0
        %v734 = vadd.f32 %v498, %v733
        %735 = vmatmul.f32.gmra.mxu0 %v609
        %v736 = vpop.f32.mrf.mxu0
        %v737 = vadd.f32 %v501, %v736
        %738 = vmatmul.f32.gmra.mxu0 %v612
        %v739 = vpop.f32.mrf.mxu0
        %v740 = vadd.f32 %v504, %v739
        %741 = vmatmul.f32.gmra.mxu0 %v615
        %v742 = vpop.f32.mrf.mxu0
        %v743 = vadd.f32 %v507, %v742
        %744 = vmatmul.f32.gmra.mxu0 %v618
        %v745 = vpop.f32.mrf.mxu0
        %v746 = vadd.f32 %v510, %v745
        %747 = vdwg.mxu0
        %v748 = vld [vmem:[%s195 + $0x2] sm:$0xff]
        %v749 = vld [vmem:[%s195 + $0xa] sm:$0xff]
        %v750 = vld [vmem:[%s195 + $0x12] sm:$0xff]
        %v751 = vld [vmem:[%s195 + $0x1a] sm:$0xff]
        %v752 = vld [vmem:[%s195 + $0x22] sm:$0xff]
        %v753 = vld [vmem:[%s195 + $0x2a] sm:$0xff]
        %v754 = vld [vmem:[%s195 + $0x32] sm:$0xff]
        %v755 = vld [vmem:[%s195 + $0x3a] sm:$0xff]
        %v756 = vld [vmem:[%s195 + $0x42] sm:$0xff]
        %v757 = vld [vmem:[%s195 + $0x4a] sm:$0xff]
        %v758 = vld [vmem:[%s195 + $0x52] sm:$0xff]
        %v759 = vld [vmem:[%s195 + $0x5a] sm:$0xff]
        %v760 = vld [vmem:[%s195 + $0x62] sm:$0xff]
        %v761 = vld [vmem:[%s195 + $0x6a] sm:$0xff]
        %v762 = vld [vmem:[%s195 + $0x72] sm:$0xff]
        %v763 = vld [vmem:[%s195 + $0x7a] sm:$0xff]
        %v764 = vld [vmem:[%s195 + $0x82] sm:$0xff]
        %v765 = vld [vmem:[%s195 + $0x8a] sm:$0xff]
        %v766 = vld [vmem:[%s195 + $0x92] sm:$0xff]
        %v767 = vld [vmem:[%s195 + $0x9a] sm:$0xff]
        %v768 = vld [vmem:[%s195 + $0xa2] sm:$0xff]
        %v769 = vld [vmem:[%s195 + $0xaa] sm:$0xff]
        %v770 = vld [vmem:[%s195 + $0xb2] sm:$0xff]
        %v771 = vld [vmem:[%s195 + $0xba] sm:$0xff]
        %v772 = vld [vmem:[%s195 + $0xc2] sm:$0xff]
        %v773 = vld [vmem:[%s195 + $0xca] sm:$0xff]
        %v774 = vld [vmem:[%s195 + $0xd2] sm:$0xff]
        %v775 = vld [vmem:[%s195 + $0xda] sm:$0xff]
        %v776 = vld [vmem:[%s195 + $0xe2] sm:$0xff]
        %v777 = vld [vmem:[%s195 + $0xea] sm:$0xff]
        %v778 = vld [vmem:[%s195 + $0xf2] sm:$0xff]
        %v779 = vld [vmem:[%s195 + $0xfa] sm:$0xff]
        %v780 = vld [vmem:[%s195 + $0x102] sm:$0xff]
        %v781 = vld [vmem:[%s195 + $0x10a] sm:$0xff]
        %v782 = vld [vmem:[%s195 + $0x112] sm:$0xff]
        %v783 = vld [vmem:[%s195 + $0x11a] sm:$0xff]
        %v784 = vld [vmem:[%s199 + $0x8] sm:$0xf]
        %v786 = vsel %vm274, %v748, 0
        %v789 = vsel %vm274, %v749, 0
        %v792 = vsel %vm274, %v750, 0
        %v795 = vsel %vm274, %v751, 0
        %v798 = vsel %vm274, %v752, 0
        %v801 = vsel %vm274, %v753, 0
        %v804 = vsel %vm274, %v754, 0
        %v807 = vsel %vm274, %v755, 0
        %v810 = vsel %vm274, %v756, 0
        %v813 = vsel %vm274, %v757, 0
        %v816 = vsel %vm274, %v758, 0
        %v819 = vsel %vm274, %v759, 0
        %v822 = vsel %vm274, %v760, 0
        %v825 = vsel %vm274, %v761, 0
        %v828 = vsel %vm274, %v762, 0
        %v831 = vsel %vm274, %v763, 0
        %v834 = vsel %vm274, %v764, 0
        %v837 = vsel %vm274, %v765, 0
        %v840 = vsel %vm274, %v766, 0
        %v843 = vsel %vm274, %v767, 0
        %v846 = vsel %vm274, %v768, 0
        %v849 = vsel %vm274, %v769, 0
        %v852 = vsel %vm274, %v770, 0
        %v855 = vsel %vm274, %v771, 0
        %v858 = vsel %vm274, %v772, 0
        %v861 = vsel %vm274, %v773, 0
        %v864 = vsel %vm274, %v774, 0
        %v867 = vsel %vm274, %v775, 0
        %v870 = vsel %vm274, %v776, 0
        %v873 = vsel %vm274, %v777, 0
        %v876 = vsel %vm274, %v778, 0
        %v879 = vsel %vm274, %v779, 0
        %v882 = vsel %vm274, %v780, 0
        %v885 = vsel %vm274, %v781, 0
        %v888 = vsel %vm274, %v782, 0
        %v891 = vsel %vm274, %v783, 0
        %v894 = vsel %vm383, %v784, 0
        %896 = vmatpush.msra.mxu0 0.0
        %897 = vmatpush.msra.mxu0 0.0
        %898 = vmatpush.msra.mxu0 0.0
        %899 = vmatpush.msra.mxu0 0.0
        %900 = vmatpush.msra.mxu0 0.0
        %901 = vmatpush.msra.mxu0 0.0
        %902 = vmatpush.msra.mxu0 0.0
        %903 = vmatpush.msra.mxu0 0.0
        %904 = vmatpush.msra.mxu0 0.0
        %905 = vmatpush.msra.mxu0 0.0
        %906 = vmatpush.msra.mxu0 0.0
        %907 = vmatpush.msra.mxu0 0.0
        %908 = vmatpush.msra.mxu0 0.0
        %909 = vmatpush.msra.mxu0 0.0
        %910 = vmatpush.msra.mxu0 0.0
        %911 = vmatpush.msra.mxu0 %v894
        %912 = vmatmul.f32.gmra.mxu0 %v786
        %v913 = vpop.f32.mrf.mxu0
        %v914 = vadd.f32 0.0, %v913
        %915 = vmatmul.f32.gmra.mxu0 %v789
        %v916 = vpop.f32.mrf.mxu0
        %v917 = vadd.f32 0.0, %v916
        %918 = vmatmul.f32.gmra.mxu0 %v792
        %v919 = vpop.f32.mrf.mxu0
        %v920 = vadd.f32 0.0, %v919
        %921 = vmatmul.f32.gmra.mxu0 %v795
        %v922 = vpop.f32.mrf.mxu0
        %v923 = vadd.f32 0.0, %v922
        %924 = vmatmul.f32.gmra.mxu0 %v798
        %v925 = vpop.f32.mrf.mxu0
        %v926 = vadd.f32 0.0, %v925
        %927 = vmatmul.f32.gmra.mxu0 %v801
        %v928 = vpop.f32.mrf.mxu0
        %v929 = vadd.f32 0.0, %v928
        %930 = vmatmul.f32.gmra.mxu0 %v804
        %v931 = vpop.f32.mrf.mxu0
        %v932 = vadd.f32 0.0, %v931
        %933 = vmatmul.f32.gmra.mxu0 %v807
        %v934 = vpop.f32.mrf.mxu0
        %v935 = vadd.f32 0.0, %v934
        %936 = vmatmul.f32.gmra.mxu0 %v810
        %v937 = vpop.f32.mrf.mxu0
        %v938 = vadd.f32 0.0, %v937
        %939 = vmatmul.f32.gmra.mxu0 %v813
        %v940 = vpop.f32.mrf.mxu0
        %v941 = vadd.f32 0.0, %v940
        %942 = vmatmul.f32.gmra.mxu0 %v816
        %v943 = vpop.f32.mrf.mxu0
        %v944 = vadd.f32 0.0, %v943
        %945 = vmatmul.f32.gmra.mxu0 %v819
        %v946 = vpop.f32.mrf.mxu0
        %v947 = vadd.f32 0.0, %v946
        %948 = vmatmul.f32.gmra.mxu0 %v822
        %v949 = vpop.f32.mrf.mxu0
        %v950 = vadd.f32 0.0, %v949
        %951 = vmatmul.f32.gmra.mxu0 %v825
        %v952 = vpop.f32.mrf.mxu0
        %v953 = vadd.f32 0.0, %v952
        %954 = vmatmul.f32.gmra.mxu0 %v828
        %v955 = vpop.f32.mrf.mxu0
        %v956 = vadd.f32 0.0, %v955
        %957 = vmatmul.f32.gmra.mxu0 %v831
        %v958 = vpop.f32.mrf.mxu0
        %v959 = vadd.f32 0.0, %v958
        %960 = vmatmul.f32.gmra.mxu0 %v834
        %v961 = vpop.f32.mrf.mxu0
        %v962 = vadd.f32 0.0, %v961
        %963 = vmatmul.f32.gmra.mxu0 %v837
        %v964 = vpop.f32.mrf.mxu0
        %v965 = vadd.f32 0.0, %v964
        %966 = vmatmul.f32.gmra.mxu0 %v840
        %v967 = vpop.f32.mrf.mxu0
        %v968 = vadd.f32 0.0, %v967
        %969 = vmatmul.f32.gmra.mxu0 %v843
        %v970 = vpop.f32.mrf.mxu0
        %v971 = vadd.f32 0.0, %v970
        %972 = vmatmul.f32.gmra.mxu0 %v846
        %v973 = vpop.f32.mrf.mxu0
        %v974 = vadd.f32 0.0, %v973
        %975 = vmatmul.f32.gmra.mxu0 %v849
        %v976 = vpop.f32.mrf.mxu0
        %v977 = vadd.f32 0.0, %v976
        %978 = vmatmul.f32.gmra.mxu0 %v852
        %v979 = vpop.f32.mrf.mxu0
        %v980 = vadd.f32 0.0, %v979
        %981 = vmatmul.f32.gmra.mxu0 %v855
        %v982 = vpop.f32.mrf.mxu0
        %v983 = vadd.f32 0.0, %v982
        %984 = vmatmul.f32.gmra.mxu0 %v858
        %v985 = vpop.f32.mrf.mxu0
        %v986 = vadd.f32 0.0, %v985
        %987 = vmatmul.f32.gmra.mxu0 %v861
        %v988 = vpop.f32.mrf.mxu0
        %v989 = vadd.f32 0.0, %v988
        %990 = vmatmul.f32.gmra.mxu0 %v864
        %v991 = vpop.f32.mrf.mxu0
        %v992 = vadd.f32 0.0, %v991
        %993 = vmatmul.f32.gmra.mxu0 %v867
        %v994 = vpop.f32.mrf.mxu0
        %v995 = vadd.f32 0.0, %v994
        %996 = vmatmul.f32.gmra.mxu0 %v870
        %v997 = vpop.f32.mrf.mxu0
        %v998 = vadd.f32 0.0, %v997
        %999 = vmatmul.f32.gmra.mxu0 %v873
        %v1000 = vpop.f32.mrf.mxu0
        %v1001 = vadd.f32 0.0, %v1000
        %1002 = vmatmul.f32.gmra.mxu0 %v876
        %v1003 = vpop.f32.mrf.mxu0
        %v1004 = vadd.f32 0.0, %v1003
        %1005 = vmatmul.f32.gmra.mxu0 %v879
        %v1006 = vpop.f32.mrf.mxu0
        %v1007 = vadd.f32 0.0, %v1006
        %1008 = vmatmul.f32.gmra.mxu0 %v882
        %v1009 = vpop.f32.mrf.mxu0
        %v1010 = vadd.f32 0.0, %v1009
        %1011 = vmatmul.f32.gmra.mxu0 %v885
        %v1012 = vpop.f32.mrf.mxu0
        %v1013 = vadd.f32 0.0, %v1012
        %1014 = vmatmul.f32.gmra.mxu0 %v888
        %v1015 = vpop.f32.mrf.mxu0
        %v1016 = vadd.f32 0.0, %v1015
        %1017 = vmatmul.f32.gmra.mxu0 %v891
        %v1018 = vpop.f32.mrf.mxu0
        %v1019 = vadd.f32 0.0, %v1018
        %1020 = vdwg.mxu0
        %v1021 = vadd.f32 %v641, %v914
        %v1022 = vadd.f32 %v644, %v917
        %v1023 = vadd.f32 %v647, %v920
        %v1024 = vadd.f32 %v650, %v923
        %v1025 = vadd.f32 %v653, %v926
        %v1026 = vadd.f32 %v656, %v929
        %v1027 = vadd.f32 %v659, %v932
        %v1028 = vadd.f32 %v662, %v935
        %v1029 = vadd.f32 %v665, %v938
        %v1030 = vadd.f32 %v668, %v941
        %v1031 = vadd.f32 %v671, %v944
        %v1032 = vadd.f32 %v674, %v947
        %v1033 = vadd.f32 %v677, %v950
        %v1034 = vadd.f32 %v680, %v953
        %v1035 = vadd.f32 %v683, %v956
        %v1036 = vadd.f32 %v686, %v959
        %v1037 = vadd.f32 %v689, %v962
        %v1038 = vadd.f32 %v692, %v965
        %v1039 = vadd.f32 %v695, %v968
        %v1040 = vadd.f32 %v698, %v971
        %v1041 = vadd.f32 %v701, %v974
        %v1042 = vadd.f32 %v704, %v977
        %v1043 = vadd.f32 %v707, %v980
        %v1044 = vadd.f32 %v710, %v983
        %v1045 = vadd.f32 %v713, %v986
        %v1046 = vadd.f32 %v716, %v989
        %v1047 = vadd.f32 %v719, %v992
        %v1048 = vadd.f32 %v722, %v995
        %v1049 = vadd.f32 %v725, %v998
        %v1050 = vadd.f32 %v728, %v1001
        %v1051 = vadd.f32 %v731, %v1004
        %v1052 = vadd.f32 %v734, %v1007
        %v1053 = vadd.f32 %v737, %v1010
        %v1054 = vadd.f32 %v740, %v1013
        %v1055 = vadd.f32 %v743, %v1016
        %v1056 = vadd.f32 %v746, %v1019
        %v1057 = vld [vmem:[%s195 + $0x12] sm:$0xff]
        %v1058 = vld [vmem:[%s195 + $0x1a] sm:$0xff]
        %v1059 = vld [vmem:[%s195 + $0x22] sm:$0xff]
        %v1060 = vld [vmem:[%s195 + $0x2a] sm:$0xff]
        %v1061 = vld [vmem:[%s195 + $0x32] sm:$0xff]
        %v1062 = vld [vmem:[%s195 + $0x3a] sm:$0xff]
        %v1063 = vld [vmem:[%s195 + $0x42] sm:$0xff]
        %v1064 = vld [vmem:[%s195 + $0x4a] sm:$0xff]
        %v1065 = vld [vmem:[%s195 + $0x52] sm:$0xff]
        %v1066 = vld [vmem:[%s195 + $0x5a] sm:$0xff]
        %v1067 = vld [vmem:[%s195 + $0x62] sm:$0xff]
        %v1068 = vld [vmem:[%s195 + $0x6a] sm:$0xff]
        %v1069 = vld [vmem:[%s195 + $0x72] sm:$0xff]
        %v1070 = vld [vmem:[%s195 + $0x7a] sm:$0xff]
        %v1071 = vld [vmem:[%s195 + $0x82] sm:$0xff]
        %v1072 = vld [vmem:[%s195 + $0x8a] sm:$0xff]
        %v1073 = vld [vmem:[%s195 + $0x92] sm:$0xff]
        %v1074 = vld [vmem:[%s195 + $0x9a] sm:$0xff]
        %v1075 = vld [vmem:[%s195 + $0xa2] sm:$0xff]
        %v1076 = vld [vmem:[%s195 + $0xaa] sm:$0xff]
        %v1077 = vld [vmem:[%s195 + $0xb2] sm:$0xff]
        %v1078 = vld [vmem:[%s195 + $0xba] sm:$0xff]
        %v1079 = vld [vmem:[%s195 + $0xc2] sm:$0xff]
        %v1080 = vld [vmem:[%s195 + $0xca] sm:$0xff]
        %v1081 = vld [vmem:[%s195 + $0xd2] sm:$0xff]
        %v1082 = vld [vmem:[%s195 + $0xda] sm:$0xff]
        %v1083 = vld [vmem:[%s195 + $0xe2] sm:$0xff]
        %v1084 = vld [vmem:[%s195 + $0xea] sm:$0xff]
        %v1085 = vld [vmem:[%s195 + $0xf2] sm:$0xff]
        %v1086 = vld [vmem:[%s195 + $0xfa] sm:$0xff]
        %v1087 = vld [vmem:[%s195 + $0x102] sm:$0xff]
        %v1088 = vld [vmem:[%s195 + $0x10a] sm:$0xff]
        %v1089 = vld [vmem:[%s195 + $0x112] sm:$0xff]
        %v1090 = vld [vmem:[%s195 + $0x11a] sm:$0xff]
        %v1091 = vld [vmem:[%s195 + $0x122] sm:$0xff]
        %v1092 = vld [vmem:[%s195 + $0x12a] sm:$0xff]
        %v1093 = vld [vmem:[%s199 + $0xc] sm:$0xf]
        %v1095 = vsel %vm274, %v1057, 0
        %v1098 = vsel %vm274, %v1058, 0
        %v1101 = vsel %vm274, %v1059, 0
        %v1104 = vsel %vm274, %v1060, 0
        %v1107 = vsel %vm274, %v1061, 0
        %v1110 = vsel %vm274, %v1062, 0
        %v1113 = vsel %vm274, %v1063, 0
        %v1116 = vsel %vm274, %v1064, 0
        %v1119 = vsel %vm274, %v1065, 0
        %v1122 = vsel %vm274, %v1066, 0
        %v1125 = vsel %vm274, %v1067, 0
        %v1128 = vsel %vm274, %v1068, 0
        %v1131 = vsel %vm274, %v1069, 0
        %v1134 = vsel %vm274, %v1070, 0
        %v1137 = vsel %vm274, %v1071, 0
        %v1140 = vsel %vm274, %v1072, 0
        %v1143 = vsel %vm274, %v1073, 0
        %v1146 = vsel %vm274, %v1074, 0
        %v1149 = vsel %vm274, %v1075, 0
        %v1152 = vsel %vm274, %v1076, 0
        %v1155 = vsel %vm274, %v1077, 0
        %v1158 = vsel %vm274, %v1078, 0
        %v1161 = vsel %vm274, %v1079, 0
        %v1164 = vsel %vm274, %v1080, 0
        %v1167 = vsel %vm274, %v1081, 0
        %v1170 = vsel %vm274, %v1082, 0
        %v1173 = vsel %vm274, %v1083, 0
        %v1176 = vsel %vm274, %v1084, 0
        %v1179 = vsel %vm274, %v1085, 0
        %v1182 = vsel %vm274, %v1086, 0
        %v1185 = vsel %vm274, %v1087, 0
        %v1188 = vsel %vm274, %v1088, 0
        %v1191 = vsel %vm274, %v1089, 0
        %v1194 = vsel %vm274, %v1090, 0
        %v1197 = vsel %vm274, %v1091, 0
        %v1200 = vsel %vm274, %v1092, 0
        %v1203 = vsel %vm383, %v1093, 0
        %1205 = vmatpush.msra.mxu0 0.0
        %1206 = vmatpush.msra.mxu0 0.0
        %1207 = vmatpush.msra.mxu0 0.0
        %1208 = vmatpush.msra.mxu0 0.0
        %1209 = vmatpush.msra.mxu0 0.0
        %1210 = vmatpush.msra.mxu0 0.0
        %1211 = vmatpush.msra.mxu0 0.0
        %1212 = vmatpush.msra.mxu0 0.0
        %1213 = vmatpush.msra.mxu0 0.0
        %1214 = vmatpush.msra.mxu0 0.0
        %1215 = vmatpush.msra.mxu0 0.0
        %1216 = vmatpush.msra.mxu0 0.0
        %1217 = vmatpush.msra.mxu0 0.0
        %1218 = vmatpush.msra.mxu0 0.0
        %1219 = vmatpush.msra.mxu0 0.0
        %1220 = vmatpush.msra.mxu0 %v1203
        %1221 = vmatmul.f32.gmra.mxu0 %v1095
        %v1222 = vpop.f32.mrf.mxu0
        %v1223 = vadd.f32 0.0, %v1222
        %1224 = vmatmul.f32.gmra.mxu0 %v1098
        %v1225 = vpop.f32.mrf.mxu0
        %v1226 = vadd.f32 0.0, %v1225
        %1227 = vmatmul.f32.gmra.mxu0 %v1101
        %v1228 = vpop.f32.mrf.mxu0
        %v1229 = vadd.f32 0.0, %v1228
        %1230 = vmatmul.f32.gmra.mxu0 %v1104
        %v1231 = vpop.f32.mrf.mxu0
        %v1232 = vadd.f32 0.0, %v1231
        %1233 = vmatmul.f32.gmra.mxu0 %v1107
        %v1234 = vpop.f32.mrf.mxu0
        %v1235 = vadd.f32 0.0, %v1234
        %1236 = vmatmul.f32.gmra.mxu0 %v1110
        %v1237 = vpop.f32.mrf.mxu0
        %v1238 = vadd.f32 0.0, %v1237
        %1239 = vmatmul.f32.gmra.mxu0 %v1113
        %v1240 = vpop.f32.mrf.mxu0
        %v1241 = vadd.f32 0.0, %v1240
        %1242 = vmatmul.f32.gmra.mxu0 %v1116
        %v1243 = vpop.f32.mrf.mxu0
        %v1244 = vadd.f32 0.0, %v1243
        %1245 = vmatmul.f32.gmra.mxu0 %v1119
        %v1246 = vpop.f32.mrf.mxu0
        %v1247 = vadd.f32 0.0, %v1246
        %1248 = vmatmul.f32.gmra.mxu0 %v1122
        %v1249 = vpop.f32.mrf.mxu0
        %v1250 = vadd.f32 0.0, %v1249
        %1251 = vmatmul.f32.gmra.mxu0 %v1125
        %v1252 = vpop.f32.mrf.mxu0
        %v1253 = vadd.f32 0.0, %v1252
        %1254 = vmatmul.f32.gmra.mxu0 %v1128
        %v1255 = vpop.f32.mrf.mxu0
        %v1256 = vadd.f32 0.0, %v1255
        %1257 = vmatmul.f32.gmra.mxu0 %v1131
        %v1258 = vpop.f32.mrf.mxu0
        %v1259 = vadd.f32 0.0, %v1258
        %1260 = vmatmul.f32.gmra.mxu0 %v1134
        %v1261 = vpop.f32.mrf.mxu0
        %v1262 = vadd.f32 0.0, %v1261
        %1263 = vmatmul.f32.gmra.mxu0 %v1137
        %v1264 = vpop.f32.mrf.mxu0
        %v1265 = vadd.f32 0.0, %v1264
        %1266 = vmatmul.f32.gmra.mxu0 %v1140
        %v1267 = vpop.f32.mrf.mxu0
        %v1268 = vadd.f32 0.0, %v1267
        %1269 = vmatmul.f32.gmra.mxu0 %v1143
        %v1270 = vpop.f32.mrf.mxu0
        %v1271 = vadd.f32 0.0, %v1270
        %1272 = vmatmul.f32.gmra.mxu0 %v1146
        %v1273 = vpop.f32.mrf.mxu0
        %v1274 = vadd.f32 0.0, %v1273
        %1275 = vmatmul.f32.gmra.mxu0 %v1149
        %v1276 = vpop.f32.mrf.mxu0
        %v1277 = vadd.f32 0.0, %v1276
        %1278 = vmatmul.f32.gmra.mxu0 %v1152
        %v1279 = vpop.f32.mrf.mxu0
        %v1280 = vadd.f32 0.0, %v1279
        %1281 = vmatmul.f32.gmra.mxu0 %v1155
        %v1282 = vpop.f32.mrf.mxu0
        %v1283 = vadd.f32 0.0, %v1282
        %1284 = vmatmul.f32.gmra.mxu0 %v1158
        %v1285 = vpop.f32.mrf.mxu0
        %v1286 = vadd.f32 0.0, %v1285
        %1287 = vmatmul.f32.gmra.mxu0 %v1161
        %v1288 = vpop.f32.mrf.mxu0
        %v1289 = vadd.f32 0.0, %v1288
        %1290 = vmatmul.f32.gmra.mxu0 %v1164
        %v1291 = vpop.f32.mrf.mxu0
        %v1292 = vadd.f32 0.0, %v1291
        %1293 = vmatmul.f32.gmra.mxu0 %v1167
        %v1294 = vpop.f32.mrf.mxu0
        %v1295 = vadd.f32 0.0, %v1294
        %1296 = vmatmul.f32.gmra.mxu0 %v1170
        %v1297 = vpop.f32.mrf.mxu0
        %v1298 = vadd.f32 0.0, %v1297
        %1299 = vmatmul.f32.gmra.mxu0 %v1173
        %v1300 = vpop.f32.mrf.mxu0
        %v1301 = vadd.f32 0.0, %v1300
        %1302 = vmatmul.f32.gmra.mxu0 %v1176
        %v1303 = vpop.f32.mrf.mxu0
        %v1304 = vadd.f32 0.0, %v1303
        %1305 = vmatmul.f32.gmra.mxu0 %v1179
        %v1306 = vpop.f32.mrf.mxu0
        %v1307 = vadd.f32 0.0, %v1306
        %1308 = vmatmul.f32.gmra.mxu0 %v1182
        %v1309 = vpop.f32.mrf.mxu0
        %v1310 = vadd.f32 0.0, %v1309
        %1311 = vmatmul.f32.gmra.mxu0 %v1185
        %v1312 = vpop.f32.mrf.mxu0
        %v1313 = vadd.f32 0.0, %v1312
        %1314 = vmatmul.f32.gmra.mxu0 %v1188
        %v1315 = vpop.f32.mrf.mxu0
        %v1316 = vadd.f32 0.0, %v1315
        %1317 = vmatmul.f32.gmra.mxu0 %v1191
        %v1318 = vpop.f32.mrf.mxu0
        %v1319 = vadd.f32 0.0, %v1318
        %1320 = vmatmul.f32.gmra.mxu0 %v1194
        %v1321 = vpop.f32.mrf.mxu0
        %v1322 = vadd.f32 0.0, %v1321
        %1323 = vmatmul.f32.gmra.mxu0 %v1197
        %v1324 = vpop.f32.mrf.mxu0
        %v1325 = vadd.f32 0.0, %v1324
        %1326 = vmatmul.f32.gmra.mxu0 %v1200
        %v1327 = vpop.f32.mrf.mxu0
        %v1328 = vadd.f32 0.0, %v1327
        %1329 = vdwg.mxu0
        %v1330 = vadd.f32 %v1021, %v1223
        %v1331 = vadd.f32 %v1022, %v1226
        %v1332 = vadd.f32 %v1023, %v1229
        %v1333 = vadd.f32 %v1024, %v1232
        %v1334 = vadd.f32 %v1025, %v1235
        %v1335 = vadd.f32 %v1026, %v1238
        %v1336 = vadd.f32 %v1027, %v1241
        %v1337 = vadd.f32 %v1028, %v1244
        %v1338 = vadd.f32 %v1029, %v1247
        %v1339 = vadd.f32 %v1030, %v1250
        %v1340 = vadd.f32 %v1031, %v1253
        %v1341 = vadd.f32 %v1032, %v1256
        %v1342 = vadd.f32 %v1033, %v1259
        %v1343 = vadd.f32 %v1034, %v1262
        %v1344 = vadd.f32 %v1035, %v1265
        %v1345 = vadd.f32 %v1036, %v1268
        %v1346 = vadd.f32 %v1037, %v1271
        %v1347 = vadd.f32 %v1038, %v1274
        %v1348 = vadd.f32 %v1039, %v1277
        %v1349 = vadd.f32 %v1040, %v1280
        %v1350 = vadd.f32 %v1041, %v1283
        %v1351 = vadd.f32 %v1042, %v1286
        %v1352 = vadd.f32 %v1043, %v1289
        %v1353 = vadd.f32 %v1044, %v1292
        %v1354 = vadd.f32 %v1045, %v1295
        %v1355 = vadd.f32 %v1046, %v1298
        %v1356 = vadd.f32 %v1047, %v1301
        %v1357 = vadd.f32 %v1048, %v1304
        %v1358 = vadd.f32 %v1049, %v1307
        %v1359 = vadd.f32 %v1050, %v1310
        %v1360 = vadd.f32 %v1051, %v1313
        %v1361 = vadd.f32 %v1052, %v1316
        %v1362 = vadd.f32 %v1053, %v1319
        %v1363 = vadd.f32 %v1054, %v1322
        %v1364 = vadd.f32 %v1055, %v1325
        %v1365 = vadd.f32 %v1056, %v1328
        %v1366 = vld [vmem:[%s195 + $0x13] sm:$0xff]
        %v1367 = vld [vmem:[%s195 + $0x1b] sm:$0xff]
        %v1368 = vld [vmem:[%s195 + $0x23] sm:$0xff]
        %v1369 = vld [vmem:[%s195 + $0x2b] sm:$0xff]
        %v1370 = vld [vmem:[%s195 + $0x33] sm:$0xff]
        %v1371 = vld [vmem:[%s195 + $0x3b] sm:$0xff]
        %v1372 = vld [vmem:[%s195 + $0x43] sm:$0xff]
        %v1373 = vld [vmem:[%s195 + $0x4b] sm:$0xff]
        %v1374 = vld [vmem:[%s195 + $0x53] sm:$0xff]
        %v1375 = vld [vmem:[%s195 + $0x5b] sm:$0xff]
        %v1376 = vld [vmem:[%s195 + $0x63] sm:$0xff]
        %v1377 = vld [vmem:[%s195 + $0x6b] sm:$0xff]
        %v1378 = vld [vmem:[%s195 + $0x73] sm:$0xff]
        %v1379 = vld [vmem:[%s195 + $0x7b] sm:$0xff]
        %v1380 = vld [vmem:[%s195 + $0x83] sm:$0xff]
        %v1381 = vld [vmem:[%s195 + $0x8b] sm:$0xff]
        %v1382 = vld [vmem:[%s195 + $0x93] sm:$0xff]
        %v1383 = vld [vmem:[%s195 + $0x9b] sm:$0xff]
        %v1384 = vld [vmem:[%s195 + $0xa3] sm:$0xff]
        %v1385 = vld [vmem:[%s195 + $0xab] sm:$0xff]
        %v1386 = vld [vmem:[%s195 + $0xb3] sm:$0xff]
        %v1387 = vld [vmem:[%s195 + $0xbb] sm:$0xff]
        %v1388 = vld [vmem:[%s195 + $0xc3] sm:$0xff]
        %v1389 = vld [vmem:[%s195 + $0xcb] sm:$0xff]
        %v1390 = vld [vmem:[%s195 + $0xd3] sm:$0xff]
        %v1391 = vld [vmem:[%s195 + $0xdb] sm:$0xff]
        %v1392 = vld [vmem:[%s195 + $0xe3] sm:$0xff]
        %v1393 = vld [vmem:[%s195 + $0xeb] sm:$0xff]
        %v1394 = vld [vmem:[%s195 + $0xf3] sm:$0xff]
        %v1395 = vld [vmem:[%s195 + $0xfb] sm:$0xff]
        %v1396 = vld [vmem:[%s195 + $0x103] sm:$0xff]
        %v1397 = vld [vmem:[%s195 + $0x10b] sm:$0xff]
        %v1398 = vld [vmem:[%s195 + $0x113] sm:$0xff]
        %v1399 = vld [vmem:[%s195 + $0x11b] sm:$0xff]
        %v1400 = vld [vmem:[%s195 + $0x123] sm:$0xff]
        %v1401 = vld [vmem:[%s195 + $0x12b] sm:$0xff]
        %v1402 = vld [vmem:[%s199 + $0x10] sm:$0xf]
        %v1404 = vsel %vm274, %v1366, 0
        %v1407 = vsel %vm274, %v1367, 0
        %v1410 = vsel %vm274, %v1368, 0
        %v1413 = vsel %vm274, %v1369, 0
        %v1416 = vsel %vm274, %v1370, 0
        %v1419 = vsel %vm274, %v1371, 0
        %v1422 = vsel %vm274, %v1372, 0
        %v1425 = vsel %vm274, %v1373, 0
        %v1428 = vsel %vm274, %v1374, 0
        %v1431 = vsel %vm274, %v1375, 0
        %v1434 = vsel %vm274, %v1376, 0
        %v1437 = vsel %vm274, %v1377, 0
        %v1440 = vsel %vm274, %v1378, 0
        %v1443 = vsel %vm274, %v1379, 0
        %v1446 = vsel %vm274, %v1380, 0
        %v1449 = vsel %vm274, %v1381, 0
        %v1452 = vsel %vm274, %v1382, 0
        %v1455 = vsel %vm274, %v1383, 0
        %v1458 = vsel %vm274, %v1384, 0
        %v1461 = vsel %vm274, %v1385, 0
        %v1464 = vsel %vm274, %v1386, 0
        %v1467 = vsel %vm274, %v1387, 0
        %v1470 = vsel %vm274, %v1388, 0
        %v1473 = vsel %vm274, %v1389, 0
        %v1476 = vsel %vm274, %v1390, 0
        %v1479 = vsel %vm274, %v1391, 0
        %v1482 = vsel %vm274, %v1392, 0
        %v1485 = vsel %vm274, %v1393, 0
        %v1488 = vsel %vm274, %v1394, 0
        %v1491 = vsel %vm274, %v1395, 0
        %v1494 = vsel %vm274, %v1396, 0
        %v1497 = vsel %vm274, %v1397, 0
        %v1500 = vsel %vm274, %v1398, 0
        %v1503 = vsel %vm274, %v1399, 0
        %v1506 = vsel %vm274, %v1400, 0
        %v1509 = vsel %vm274, %v1401, 0
        %v1512 = vsel %vm383, %v1402, 0
        %1514 = vmatpush.msra.mxu0 0.0
        %1515 = vmatpush.msra.mxu0 0.0
        %1516 = vmatpush.msra.mxu0 0.0
        %1517 = vmatpush.msra.mxu0 0.0
        %1518 = vmatpush.msra.mxu0 0.0
        %1519 = vmatpush.msra.mxu0 0.0
        %1520 = vmatpush.msra.mxu0 0.0
        %1521 = vmatpush.msra.mxu0 0.0
        %1522 = vmatpush.msra.mxu0 0.0
        %1523 = vmatpush.msra.mxu0 0.0
        %1524 = vmatpush.msra.mxu0 0.0
        %1525 = vmatpush.msra.mxu0 0.0
        %1526 = vmatpush.msra.mxu0 0.0
        %1527 = vmatpush.msra.mxu0 0.0
        %1528 = vmatpush.msra.mxu0 0.0
        %1529 = vmatpush.msra.mxu0 %v1512
        %1530 = vmatmul.f32.gmra.mxu0 %v1404
        %v1531 = vpop.f32.mrf.mxu0
        %v1532 = vadd.f32 0.0, %v1531
        %1533 = vmatmul.f32.gmra.mxu0 %v1407
        %v1534 = vpop.f32.mrf.mxu0
        %v1535 = vadd.f32 0.0, %v1534
        %1536 = vmatmul.f32.gmra.mxu0 %v1410
        %v1537 = vpop.f32.mrf.mxu0
        %v1538 = vadd.f32 0.0, %v1537
        %1539 = vmatmul.f32.gmra.mxu0 %v1413
        %v1540 = vpop.f32.mrf.mxu0
        %v1541 = vadd.f32 0.0, %v1540
        %1542 = vmatmul.f32.gmra.mxu0 %v1416
        %v1543 = vpop.f32.mrf.mxu0
        %v1544 = vadd.f32 0.0, %v1543
        %1545 = vmatmul.f32.gmra.mxu0 %v1419
        %v1546 = vpop.f32.mrf.mxu0
        %v1547 = vadd.f32 0.0, %v1546
        %1548 = vmatmul.f32.gmra.mxu0 %v1422
        %v1549 = vpop.f32.mrf.mxu0
        %v1550 = vadd.f32 0.0, %v1549
        %1551 = vmatmul.f32.gmra.mxu0 %v1425
        %v1552 = vpop.f32.mrf.mxu0
        %v1553 = vadd.f32 0.0, %v1552
        %1554 = vmatmul.f32.gmra.mxu0 %v1428
        %v1555 = vpop.f32.mrf.mxu0
        %v1556 = vadd.f32 0.0, %v1555
        %1557 = vmatmul.f32.gmra.mxu0 %v1431
        %v1558 = vpop.f32.mrf.mxu0
        %v1559 = vadd.f32 0.0, %v1558
        %1560 = vmatmul.f32.gmra.mxu0 %v1434
        %v1561 = vpop.f32.mrf.mxu0
        %v1562 = vadd.f32 0.0, %v1561
        %1563 = vmatmul.f32.gmra.mxu0 %v1437
        %v1564 = vpop.f32.mrf.mxu0
        %v1565 = vadd.f32 0.0, %v1564
        %1566 = vmatmul.f32.gmra.mxu0 %v1440
        %v1567 = vpop.f32.mrf.mxu0
        %v1568 = vadd.f32 0.0, %v1567
        %1569 = vmatmul.f32.gmra.mxu0 %v1443
        %v1570 = vpop.f32.mrf.mxu0
        %v1571 = vadd.f32 0.0, %v1570
        %1572 = vmatmul.f32.gmra.mxu0 %v1446
        %v1573 = vpop.f32.mrf.mxu0
        %v1574 = vadd.f32 0.0, %v1573
        %1575 = vmatmul.f32.gmra.mxu0 %v1449
        %v1576 = vpop.f32.mrf.mxu0
        %v1577 = vadd.f32 0.0, %v1576
        %1578 = vmatmul.f32.gmra.mxu0 %v1452
        %v1579 = vpop.f32.mrf.mxu0
        %v1580 = vadd.f32 0.0, %v1579
        %1581 = vmatmul.f32.gmra.mxu0 %v1455
        %v1582 = vpop.f32.mrf.mxu0
        %v1583 = vadd.f32 0.0, %v1582
        %1584 = vmatmul.f32.gmra.mxu0 %v1458
        %v1585 = vpop.f32.mrf.mxu0
        %v1586 = vadd.f32 0.0, %v1585
        %1587 = vmatmul.f32.gmra.mxu0 %v1461
        %v1588 = vpop.f32.mrf.mxu0
        %v1589 = vadd.f32 0.0, %v1588
        %1590 = vmatmul.f32.gmra.mxu0 %v1464
        %v1591 = vpop.f32.mrf.mxu0
        %v1592 = vadd.f32 0.0, %v1591
        %1593 = vmatmul.f32.gmra.mxu0 %v1467
        %v1594 = vpop.f32.mrf.mxu0
        %v1595 = vadd.f32 0.0, %v1594
        %1596 = vmatmul.f32.gmra.mxu0 %v1470
        %v1597 = vpop.f32.mrf.mxu0
        %v1598 = vadd.f32 0.0, %v1597
        %1599 = vmatmul.f32.gmra.mxu0 %v1473
        %v1600 = vpop.f32.mrf.mxu0
        %v1601 = vadd.f32 0.0, %v1600
        %1602 = vmatmul.f32.gmra.mxu0 %v1476
        %v1603 = vpop.f32.mrf.mxu0
        %v1604 = vadd.f32 0.0, %v1603
        %1605 = vmatmul.f32.gmra.mxu0 %v1479
        %v1606 = vpop.f32.mrf.mxu0
        %v1607 = vadd.f32 0.0, %v1606
        %1608 = vmatmul.f32.gmra.mxu0 %v1482
        %v1609 = vpop.f32.mrf.mxu0
        %v1610 = vadd.f32 0.0, %v1609
        %1611 = vmatmul.f32.gmra.mxu0 %v1485
        %v1612 = vpop.f32.mrf.mxu0
        %v1613 = vadd.f32 0.0, %v1612
        %1614 = vmatmul.f32.gmra.mxu0 %v1488
        %v1615 = vpop.f32.mrf.mxu0
        %v1616 = vadd.f32 0.0, %v1615
        %1617 = vmatmul.f32.gmra.mxu0 %v1491
        %v1618 = vpop.f32.mrf.mxu0
        %v1619 = vadd.f32 0.0, %v1618
        %1620 = vmatmul.f32.gmra.mxu0 %v1494
        %v1621 = vpop.f32.mrf.mxu0
        %v1622 = vadd.f32 0.0, %v1621
        %1623 = vmatmul.f32.gmra.mxu0 %v1497
        %v1624 = vpop.f32.mrf.mxu0
        %v1625 = vadd.f32 0.0, %v1624
        %1626 = vmatmul.f32.gmra.mxu0 %v1500
        %v1627 = vpop.f32.mrf.mxu0
        %v1628 = vadd.f32 0.0, %v1627
        %1629 = vmatmul.f32.gmra.mxu0 %v1503
        %v1630 = vpop.f32.mrf.mxu0
        %v1631 = vadd.f32 0.0, %v1630
        %1632 = vmatmul.f32.gmra.mxu0 %v1506
        %v1633 = vpop.f32.mrf.mxu0
        %v1634 = vadd.f32 0.0, %v1633
        %1635 = vmatmul.f32.gmra.mxu0 %v1509
        %v1636 = vpop.f32.mrf.mxu0
        %v1637 = vadd.f32 0.0, %v1636
        %1638 = vdwg.mxu0
        %v1639 = vadd.f32 %v1330, %v1532
        %v1640 = vadd.f32 %v1331, %v1535
        %v1641 = vadd.f32 %v1332, %v1538
        %v1642 = vadd.f32 %v1333, %v1541
        %v1643 = vadd.f32 %v1334, %v1544
        %v1644 = vadd.f32 %v1335, %v1547
        %v1645 = vadd.f32 %v1336, %v1550
        %v1646 = vadd.f32 %v1337, %v1553
        %v1647 = vadd.f32 %v1338, %v1556
        %v1648 = vadd.f32 %v1339, %v1559
        %v1649 = vadd.f32 %v1340, %v1562
        %v1650 = vadd.f32 %v1341, %v1565
        %v1651 = vadd.f32 %v1342, %v1568
        %v1652 = vadd.f32 %v1343, %v1571
        %v1653 = vadd.f32 %v1344, %v1574
        %v1654 = vadd.f32 %v1345, %v1577
        %v1655 = vadd.f32 %v1346, %v1580
        %v1656 = vadd.f32 %v1347, %v1583
        %v1657 = vadd.f32 %v1348, %v1586
        %v1658 = vadd.f32 %v1349, %v1589
        %v1659 = vadd.f32 %v1350, %v1592
        %v1660 = vadd.f32 %v1351, %v1595
        %v1661 = vadd.f32 %v1352, %v1598
        %v1662 = vadd.f32 %v1353, %v1601
        %v1663 = vadd.f32 %v1354, %v1604
        %v1664 = vadd.f32 %v1355, %v1607
        %v1665 = vadd.f32 %v1356, %v1610
        %v1666 = vadd.f32 %v1357, %v1613
        %v1667 = vadd.f32 %v1358, %v1616
        %v1668 = vadd.f32 %v1359, %v1619
        %v1669 = vadd.f32 %v1360, %v1622
        %v1670 = vadd.f32 %v1361, %v1625
        %v1671 = vadd.f32 %v1362, %v1628
        %v1672 = vadd.f32 %v1363, %v1631
        %v1673 = vadd.f32 %v1364, %v1634
        %v1674 = vadd.f32 %v1365, %v1637
        %v1675 = vld [vmem:[%s195 + $0x14] sm:$0xff]
        %v1676 = vld [vmem:[%s195 + $0x1c] sm:$0xff]
        %v1677 = vld [vmem:[%s195 + $0x24] sm:$0xff]
        %v1678 = vld [vmem:[%s195 + $0x2c] sm:$0xff]
        %v1679 = vld [vmem:[%s195 + $0x34] sm:$0xff]
        %v1680 = vld [vmem:[%s195 + $0x3c] sm:$0xff]
        %v1681 = vld [vmem:[%s195 + $0x44] sm:$0xff]
        %v1682 = vld [vmem:[%s195 + $0x4c] sm:$0xff]
        %v1683 = vld [vmem:[%s195 + $0x54] sm:$0xff]
        %v1684 = vld [vmem:[%s195 + $0x5c] sm:$0xff]
        %v1685 = vld [vmem:[%s195 + $0x64] sm:$0xff]
        %v1686 = vld [vmem:[%s195 + $0x6c] sm:$0xff]
        %v1687 = vld [vmem:[%s195 + $0x74] sm:$0xff]
        %v1688 = vld [vmem:[%s195 + $0x7c] sm:$0xff]
        %v1689 = vld [vmem:[%s195 + $0x84] sm:$0xff]
        %v1690 = vld [vmem:[%s195 + $0x8c] sm:$0xff]
        %v1691 = vld [vmem:[%s195 + $0x94] sm:$0xff]
        %v1692 = vld [vmem:[%s195 + $0x9c] sm:$0xff]
        %v1693 = vld [vmem:[%s195 + $0xa4] sm:$0xff]
        %v1694 = vld [vmem:[%s195 + $0xac] sm:$0xff]
        %v1695 = vld [vmem:[%s195 + $0xb4] sm:$0xff]
        %v1696 = vld [vmem:[%s195 + $0xbc] sm:$0xff]
        %v1697 = vld [vmem:[%s195 + $0xc4] sm:$0xff]
        %v1698 = vld [vmem:[%s195 + $0xcc] sm:$0xff]
        %v1699 = vld [vmem:[%s195 + $0xd4] sm:$0xff]
        %v1700 = vld [vmem:[%s195 + $0xdc] sm:$0xff]
        %v1701 = vld [vmem:[%s195 + $0xe4] sm:$0xff]
        %v1702 = vld [vmem:[%s195 + $0xec] sm:$0xff]
        %v1703 = vld [vmem:[%s195 + $0xf4] sm:$0xff]
        %v1704 = vld [vmem:[%s195 + $0xfc] sm:$0xff]
        %v1705 = vld [vmem:[%s195 + $0x104] sm:$0xff]
        %v1706 = vld [vmem:[%s195 + $0x10c] sm:$0xff]
        %v1707 = vld [vmem:[%s195 + $0x114] sm:$0xff]
        %v1708 = vld [vmem:[%s195 + $0x11c] sm:$0xff]
        %v1709 = vld [vmem:[%s195 + $0x124] sm:$0xff]
        %v1710 = vld [vmem:[%s195 + $0x12c] sm:$0xff]
        %v1711 = vld [vmem:[%s199 + $0x14] sm:$0xf]
        %v1713 = vsel %vm274, %v1675, 0
        %v1716 = vsel %vm274, %v1676, 0
        %v1719 = vsel %vm274, %v1677, 0
        %v1722 = vsel %vm274, %v1678, 0
        %v1725 = vsel %vm274, %v1679, 0
        %v1728 = vsel %vm274, %v1680, 0
        %v1731 = vsel %vm274, %v1681, 0
        %v1734 = vsel %vm274, %v1682, 0
        %v1737 = vsel %vm274, %v1683, 0
        %v1740 = vsel %vm274, %v1684, 0
        %v1743 = vsel %vm274, %v1685, 0
        %v1746 = vsel %vm274, %v1686, 0
        %v1749 = vsel %vm274, %v1687, 0
        %v1752 = vsel %vm274, %v1688, 0
        %v1755 = vsel %vm274, %v1689, 0
        %v1758 = vsel %vm274, %v1690, 0
        %v1761 = vsel %vm274, %v1691, 0
        %v1764 = vsel %vm274, %v1692, 0
        %v1767 = vsel %vm274, %v1693, 0
        %v1770 = vsel %vm274, %v1694, 0
        %v1773 = vsel %vm274, %v1695, 0
        %v1776 = vsel %vm274, %v1696, 0
        %v1779 = vsel %vm274, %v1697, 0
        %v1782 = vsel %vm274, %v1698, 0
        %v1785 = vsel %vm274, %v1699, 0
        %v1788 = vsel %vm274, %v1700, 0
        %v1791 = vsel %vm274, %v1701, 0
        %v1794 = vsel %vm274, %v1702, 0
        %v1797 = vsel %vm274, %v1703, 0
        %v1800 = vsel %vm274, %v1704, 0
        %v1803 = vsel %vm274, %v1705, 0
        %v1806 = vsel %vm274, %v1706, 0
        %v1809 = vsel %vm274, %v1707, 0
        %v1812 = vsel %vm274, %v1708, 0
        %v1815 = vsel %vm274, %v1709, 0
        %v1818 = vsel %vm274, %v1710, 0
        %v1821 = vsel %vm383, %v1711, 0
        %1823 = vmatpush.msra.mxu0 0.0
        %1824 = vmatpush.msra.mxu0 0.0
        %1825 = vmatpush.msra.mxu0 0.0
        %1826 = vmatpush.msra.mxu0 0.0
        %1827 = vmatpush.msra.mxu0 0.0
        %1828 = vmatpush.msra.mxu0 0.0
        %1829 = vmatpush.msra.mxu0 0.0
        %1830 = vmatpush.msra.mxu0 0.0
        %1831 = vmatpush.msra.mxu0 0.0
        %1832 = vmatpush.msra.mxu0 0.0
        %1833 = vmatpush.msra.mxu0 0.0
        %1834 = vmatpush.msra.mxu0 0.0
        %1835 = vmatpush.msra.mxu0 0.0
        %1836 = vmatpush.msra.mxu0 0.0
        %1837 = vmatpush.msra.mxu0 0.0
        %1838 = vmatpush.msra.mxu0 %v1821
        %1839 = vmatmul.f32.gmra.mxu0 %v1713
        %v1840 = vpop.f32.mrf.mxu0
        %v1841 = vadd.f32 0.0, %v1840
        %1842 = vmatmul.f32.gmra.mxu0 %v1716
        %v1843 = vpop.f32.mrf.mxu0
        %v1844 = vadd.f32 0.0, %v1843
        %1845 = vmatmul.f32.gmra.mxu0 %v1719
        %v1846 = vpop.f32.mrf.mxu0
        %v1847 = vadd.f32 0.0, %v1846
        %1848 = vmatmul.f32.gmra.mxu0 %v1722
        %v1849 = vpop.f32.mrf.mxu0
        %v1850 = vadd.f32 0.0, %v1849
        %1851 = vmatmul.f32.gmra.mxu0 %v1725
        %v1852 = vpop.f32.mrf.mxu0
        %v1853 = vadd.f32 0.0, %v1852
        %1854 = vmatmul.f32.gmra.mxu0 %v1728
        %v1855 = vpop.f32.mrf.mxu0
        %v1856 = vadd.f32 0.0, %v1855
        %1857 = vmatmul.f32.gmra.mxu0 %v1731
        %v1858 = vpop.f32.mrf.mxu0
        %v1859 = vadd.f32 0.0, %v1858
        %1860 = vmatmul.f32.gmra.mxu0 %v1734
        %v1861 = vpop.f32.mrf.mxu0
        %v1862 = vadd.f32 0.0, %v1861
        %1863 = vmatmul.f32.gmra.mxu0 %v1737
        %v1864 = vpop.f32.mrf.mxu0
        %v1865 = vadd.f32 0.0, %v1864
        %1866 = vmatmul.f32.gmra.mxu0 %v1740
        %v1867 = vpop.f32.mrf.mxu0
        %v1868 = vadd.f32 0.0, %v1867
        %1869 = vmatmul.f32.gmra.mxu0 %v1743
        %v1870 = vpop.f32.mrf.mxu0
        %v1871 = vadd.f32 0.0, %v1870
        %1872 = vmatmul.f32.gmra.mxu0 %v1746
        %v1873 = vpop.f32.mrf.mxu0
        %v1874 = vadd.f32 0.0, %v1873
        %1875 = vmatmul.f32.gmra.mxu0 %v1749
        %v1876 = vpop.f32.mrf.mxu0
        %v1877 = vadd.f32 0.0, %v1876
        %1878 = vmatmul.f32.gmra.mxu0 %v1752
        %v1879 = vpop.f32.mrf.mxu0
        %v1880 = vadd.f32 0.0, %v1879
        %1881 = vmatmul.f32.gmra.mxu0 %v1755
        %v1882 = vpop.f32.mrf.mxu0
        %v1883 = vadd.f32 0.0, %v1882
        %1884 = vmatmul.f32.gmra.mxu0 %v1758
        %v1885 = vpop.f32.mrf.mxu0
        %v1886 = vadd.f32 0.0, %v1885
        %1887 = vmatmul.f32.gmra.mxu0 %v1761
        %v1888 = vpop.f32.mrf.mxu0
        %v1889 = vadd.f32 0.0, %v1888
        %1890 = vmatmul.f32.gmra.mxu0 %v1764
        %v1891 = vpop.f32.mrf.mxu0
        %v1892 = vadd.f32 0.0, %v1891
        %1893 = vmatmul.f32.gmra.mxu0 %v1767
        %v1894 = vpop.f32.mrf.mxu0
        %v1895 = vadd.f32 0.0, %v1894
        %1896 = vmatmul.f32.gmra.mxu0 %v1770
        %v1897 = vpop.f32.mrf.mxu0
        %v1898 = vadd.f32 0.0, %v1897
        %1899 = vmatmul.f32.gmra.mxu0 %v1773
        %v1900 = vpop.f32.mrf.mxu0
        %v1901 = vadd.f32 0.0, %v1900
        %1902 = vmatmul.f32.gmra.mxu0 %v1776
        %v1903 = vpop.f32.mrf.mxu0
        %v1904 = vadd.f32 0.0, %v1903
        %1905 = vmatmul.f32.gmra.mxu0 %v1779
        %v1906 = vpop.f32.mrf.mxu0
        %v1907 = vadd.f32 0.0, %v1906
        %1908 = vmatmul.f32.gmra.mxu0 %v1782
        %v1909 = vpop.f32.mrf.mxu0
        %v1910 = vadd.f32 0.0, %v1909
        %1911 = vmatmul.f32.gmra.mxu0 %v1785
        %v1912 = vpop.f32.mrf.mxu0
        %v1913 = vadd.f32 0.0, %v1912
        %1914 = vmatmul.f32.gmra.mxu0 %v1788
        %v1915 = vpop.f32.mrf.mxu0
        %v1916 = vadd.f32 0.0, %v1915
        %1917 = vmatmul.f32.gmra.mxu0 %v1791
        %v1918 = vpop.f32.mrf.mxu0
        %v1919 = vadd.f32 0.0, %v1918
        %1920 = vmatmul.f32.gmra.mxu0 %v1794
        %v1921 = vpop.f32.mrf.mxu0
        %v1922 = vadd.f32 0.0, %v1921
        %1923 = vmatmul.f32.gmra.mxu0 %v1797
        %v1924 = vpop.f32.mrf.mxu0
        %v1925 = vadd.f32 0.0, %v1924
        %1926 = vmatmul.f32.gmra.mxu0 %v1800
        %v1927 = vpop.f32.mrf.mxu0
        %v1928 = vadd.f32 0.0, %v1927
        %1929 = vmatmul.f32.gmra.mxu0 %v1803
        %v1930 = vpop.f32.mrf.mxu0
        %v1931 = vadd.f32 0.0, %v1930
        %1932 = vmatmul.f32.gmra.mxu0 %v1806
        %v1933 = vpop.f32.mrf.mxu0
        %v1934 = vadd.f32 0.0, %v1933
        %1935 = vmatmul.f32.gmra.mxu0 %v1809
        %v1936 = vpop.f32.mrf.mxu0
        %v1937 = vadd.f32 0.0, %v1936
        %1938 = vmatmul.f32.gmra.mxu0 %v1812
        %v1939 = vpop.f32.mrf.mxu0
        %v1940 = vadd.f32 0.0, %v1939
        %1941 = vmatmul.f32.gmra.mxu0 %v1815
        %v1942 = vpop.f32.mrf.mxu0
        %v1943 = vadd.f32 0.0, %v1942
        %1944 = vmatmul.f32.gmra.mxu0 %v1818
        %v1945 = vpop.f32.mrf.mxu0
        %v1946 = vadd.f32 0.0, %v1945
        %1947 = vdwg.mxu0
        %v1948 = vadd.f32 %v1639, %v1841
        %v1949 = vadd.f32 %v1640, %v1844
        %v1950 = vadd.f32 %v1641, %v1847
        %v1951 = vadd.f32 %v1642, %v1850
        %v1952 = vadd.f32 %v1643, %v1853
        %v1953 = vadd.f32 %v1644, %v1856
        %v1954 = vadd.f32 %v1645, %v1859
        %v1955 = vadd.f32 %v1646, %v1862
        %v1956 = vadd.f32 %v1647, %v1865
        %v1957 = vadd.f32 %v1648, %v1868
        %v1958 = vadd.f32 %v1649, %v1871
        %v1959 = vadd.f32 %v1650, %v1874
        %v1960 = vadd.f32 %v1651, %v1877
        %v1961 = vadd.f32 %v1652, %v1880
        %v1962 = vadd.f32 %v1653, %v1883
        %v1963 = vadd.f32 %v1654, %v1886
        %v1964 = vadd.f32 %v1655, %v1889
        %v1965 = vadd.f32 %v1656, %v1892
        %v1966 = vadd.f32 %v1657, %v1895
        %v1967 = vadd.f32 %v1658, %v1898
        %v1968 = vadd.f32 %v1659, %v1901
        %v1969 = vadd.f32 %v1660, %v1904
        %v1970 = vadd.f32 %v1661, %v1907
        %v1971 = vadd.f32 %v1662, %v1910
        %v1972 = vadd.f32 %v1663, %v1913
        %v1973 = vadd.f32 %v1664, %v1916
        %v1974 = vadd.f32 %v1665, %v1919
        %v1975 = vadd.f32 %v1666, %v1922
        %v1976 = vadd.f32 %v1667, %v1925
        %v1977 = vadd.f32 %v1668, %v1928
        %v1978 = vadd.f32 %v1669, %v1931
        %v1979 = vadd.f32 %v1670, %v1934
        %v1980 = vadd.f32 %v1671, %v1937
        %v1981 = vadd.f32 %v1672, %v1940
        %v1982 = vadd.f32 %v1673, %v1943
        %v1983 = vadd.f32 %v1674, %v1946
        %v1984 = vld [vmem:[%s195 + $0x24] sm:$0xff]
        %v1985 = vld [vmem:[%s195 + $0x2c] sm:$0xff]
        %v1986 = vld [vmem:[%s195 + $0x34] sm:$0xff]
        %v1987 = vld [vmem:[%s195 + $0x3c] sm:$0xff]
        %v1988 = vld [vmem:[%s195 + $0x44] sm:$0xff]
        %v1989 = vld [vmem:[%s195 + $0x4c] sm:$0xff]
        %v1990 = vld [vmem:[%s195 + $0x54] sm:$0xff]
        %v1991 = vld [vmem:[%s195 + $0x5c] sm:$0xff]
        %v1992 = vld [vmem:[%s195 + $0x64] sm:$0xff]
        %v1993 = vld [vmem:[%s195 + $0x6c] sm:$0xff]
        %v1994 = vld [vmem:[%s195 + $0x74] sm:$0xff]
        %v1995 = vld [vmem:[%s195 + $0x7c] sm:$0xff]
        %v1996 = vld [vmem:[%s195 + $0x84] sm:$0xff]
        %v1997 = vld [vmem:[%s195 + $0x8c] sm:$0xff]
        %v1998 = vld [vmem:[%s195 + $0x94] sm:$0xff]
        %v1999 = vld [vmem:[%s195 + $0x9c] sm:$0xff]
        %v2000 = vld [vmem:[%s195 + $0xa4] sm:$0xff]
        %v2001 = vld [vmem:[%s195 + $0xac] sm:$0xff]
        %v2002 = vld [vmem:[%s195 + $0xb4] sm:$0xff]
        %v2003 = vld [vmem:[%s195 + $0xbc] sm:$0xff]
        %v2004 = vld [vmem:[%s195 + $0xc4] sm:$0xff]
        %v2005 = vld [vmem:[%s195 + $0xcc] sm:$0xff]
        %v2006 = vld [vmem:[%s195 + $0xd4] sm:$0xff]
        %v2007 = vld [vmem:[%s195 + $0xdc] sm:$0xff]
        %v2008 = vld [vmem:[%s195 + $0xe4] sm:$0xff]
        %v2009 = vld [vmem:[%s195 + $0xec] sm:$0xff]
        %v2010 = vld [vmem:[%s195 + $0xf4] sm:$0xff]
        %v2011 = vld [vmem:[%s195 + $0xfc] sm:$0xff]
        %v2012 = vld [vmem:[%s195 + $0x104] sm:$0xff]
        %v2013 = vld [vmem:[%s195 + $0x10c] sm:$0xff]
        %v2014 = vld [vmem:[%s195 + $0x114] sm:$0xff]
        %v2015 = vld [vmem:[%s195 + $0x11c] sm:$0xff]
        %v2016 = vld [vmem:[%s195 + $0x124] sm:$0xff]
        %v2017 = vld [vmem:[%s195 + $0x12c] sm:$0xff]
        %v2018 = vld [vmem:[%s195 + $0x134] sm:$0xff]
        %v2019 = vld [vmem:[%s195 + $0x13c] sm:$0xff]
        %v2020 = vld [vmem:[%s199 + $0x18] sm:$0xf]
        %v2022 = vsel %vm274, %v1984, 0
        %v2025 = vsel %vm274, %v1985, 0
        %v2028 = vsel %vm274, %v1986, 0
        %v2031 = vsel %vm274, %v1987, 0
        %v2034 = vsel %vm274, %v1988, 0
        %v2037 = vsel %vm274, %v1989, 0
        %v2040 = vsel %vm274, %v1990, 0
        %v2043 = vsel %vm274, %v1991, 0
        %v2046 = vsel %vm274, %v1992, 0
        %v2049 = vsel %vm274, %v1993, 0
        %v2052 = vsel %vm274, %v1994, 0
        %v2055 = vsel %vm274, %v1995, 0
        %v2058 = vsel %vm274, %v1996, 0
        %v2061 = vsel %vm274, %v1997, 0
        %v2064 = vsel %vm274, %v1998, 0
        %v2067 = vsel %vm274, %v1999, 0
        %v2070 = vsel %vm274, %v2000, 0
        %v2073 = vsel %vm274, %v2001, 0
        %v2076 = vsel %vm274, %v2002, 0
        %v2079 = vsel %vm274, %v2003, 0
        %v2082 = vsel %vm274, %v2004, 0
        %v2085 = vsel %vm274, %v2005, 0
        %v2088 = vsel %vm274, %v2006, 0
        %v2091 = vsel %vm274, %v2007, 0
        %v2094 = vsel %vm274, %v2008, 0
        %v2097 = vsel %vm274, %v2009, 0
        %v2100 = vsel %vm274, %v2010, 0
        %v2103 = vsel %vm274, %v2011, 0
        %v2106 = vsel %vm274, %v2012, 0
        %v2109 = vsel %vm274, %v2013, 0
        %v2112 = vsel %vm274, %v2014, 0
        %v2115 = vsel %vm274, %v2015, 0
        %v2118 = vsel %vm274, %v2016, 0
        %v2121 = vsel %vm274, %v2017, 0
        %v2124 = vsel %vm274, %v2018, 0
        %v2127 = vsel %vm274, %v2019, 0
        %v2130 = vsel %vm383, %v2020, 0
        %2132 = vmatpush.msra.mxu0 0.0
        %2133 = vmatpush.msra.mxu0 0.0
        %2134 = vmatpush.msra.mxu0 0.0
        %2135 = vmatpush.msra.mxu0 0.0
        %2136 = vmatpush.msra.mxu0 0.0
        %2137 = vmatpush.msra.mxu0 0.0
        %2138 = vmatpush.msra.mxu0 0.0
        %2139 = vmatpush.msra.mxu0 0.0
        %2140 = vmatpush.msra.mxu0 0.0
        %2141 = vmatpush.msra.mxu0 0.0
        %2142 = vmatpush.msra.mxu0 0.0
        %2143 = vmatpush.msra.mxu0 0.0
        %2144 = vmatpush.msra.mxu0 0.0
        %2145 = vmatpush.msra.mxu0 0.0
        %2146 = vmatpush.msra.mxu0 0.0
        %2147 = vmatpush.msra.mxu0 %v2130
        %2148 = vmatmul.f32.gmra.mxu0 %v2022
        %v2149 = vpop.f32.mrf.mxu0
        %v2150 = vadd.f32 0.0, %v2149
        %2151 = vmatmul.f32.gmra.mxu0 %v2025
        %v2152 = vpop.f32.mrf.mxu0
        %v2153 = vadd.f32 0.0, %v2152
        %2154 = vmatmul.f32.gmra.mxu0 %v2028
        %v2155 = vpop.f32.mrf.mxu0
        %v2156 = vadd.f32 0.0, %v2155
        %2157 = vmatmul.f32.gmra.mxu0 %v2031
        %v2158 = vpop.f32.mrf.mxu0
        %v2159 = vadd.f32 0.0, %v2158
        %2160 = vmatmul.f32.gmra.mxu0 %v2034
        %v2161 = vpop.f32.mrf.mxu0
        %v2162 = vadd.f32 0.0, %v2161
        %2163 = vmatmul.f32.gmra.mxu0 %v2037
        %v2164 = vpop.f32.mrf.mxu0
        %v2165 = vadd.f32 0.0, %v2164
        %2166 = vmatmul.f32.gmra.mxu0 %v2040
        %v2167 = vpop.f32.mrf.mxu0
        %v2168 = vadd.f32 0.0, %v2167
        %2169 = vmatmul.f32.gmra.mxu0 %v2043
        %v2170 = vpop.f32.mrf.mxu0
        %v2171 = vadd.f32 0.0, %v2170
        %2172 = vmatmul.f32.gmra.mxu0 %v2046
        %v2173 = vpop.f32.mrf.mxu0
        %v2174 = vadd.f32 0.0, %v2173
        %2175 = vmatmul.f32.gmra.mxu0 %v2049
        %v2176 = vpop.f32.mrf.mxu0
        %v2177 = vadd.f32 0.0, %v2176
        %2178 = vmatmul.f32.gmra.mxu0 %v2052
        %v2179 = vpop.f32.mrf.mxu0
        %v2180 = vadd.f32 0.0, %v2179
        %2181 = vmatmul.f32.gmra.mxu0 %v2055
        %v2182 = vpop.f32.mrf.mxu0
        %v2183 = vadd.f32 0.0, %v2182
        %2184 = vmatmul.f32.gmra.mxu0 %v2058
        %v2185 = vpop.f32.mrf.mxu0
        %v2186 = vadd.f32 0.0, %v2185
        %2187 = vmatmul.f32.gmra.mxu0 %v2061
        %v2188 = vpop.f32.mrf.mxu0
        %v2189 = vadd.f32 0.0, %v2188
        %2190 = vmatmul.f32.gmra.mxu0 %v2064
        %v2191 = vpop.f32.mrf.mxu0
        %v2192 = vadd.f32 0.0, %v2191
        %2193 = vmatmul.f32.gmra.mxu0 %v2067
        %v2194 = vpop.f32.mrf.mxu0
        %v2195 = vadd.f32 0.0, %v2194
        %2196 = vmatmul.f32.gmra.mxu0 %v2070
        %v2197 = vpop.f32.mrf.mxu0
        %v2198 = vadd.f32 0.0, %v2197
        %2199 = vmatmul.f32.gmra.mxu0 %v2073
        %v2200 = vpop.f32.mrf.mxu0
        %v2201 = vadd.f32 0.0, %v2200
        %2202 = vmatmul.f32.gmra.mxu0 %v2076
        %v2203 = vpop.f32.mrf.mxu0
        %v2204 = vadd.f32 0.0, %v2203
        %2205 = vmatmul.f32.gmra.mxu0 %v2079
        %v2206 = vpop.f32.mrf.mxu0
        %v2207 = vadd.f32 0.0, %v2206
        %2208 = vmatmul.f32.gmra.mxu0 %v2082
        %v2209 = vpop.f32.mrf.mxu0
        %v2210 = vadd.f32 0.0, %v2209
        %2211 = vmatmul.f32.gmra.mxu0 %v2085
        %v2212 = vpop.f32.mrf.mxu0
        %v2213 = vadd.f32 0.0, %v2212
        %2214 = vmatmul.f32.gmra.mxu0 %v2088
        %v2215 = vpop.f32.mrf.mxu0
        %v2216 = vadd.f32 0.0, %v2215
        %2217 = vmatmul.f32.gmra.mxu0 %v2091
        %v2218 = vpop.f32.mrf.mxu0
        %v2219 = vadd.f32 0.0, %v2218
        %2220 = vmatmul.f32.gmra.mxu0 %v2094
        %v2221 = vpop.f32.mrf.mxu0
        %v2222 = vadd.f32 0.0, %v2221
        %2223 = vmatmul.f32.gmra.mxu0 %v2097
        %v2224 = vpop.f32.mrf.mxu0
        %v2225 = vadd.f32 0.0, %v2224
        %2226 = vmatmul.f32.gmra.mxu0 %v2100
        %v2227 = vpop.f32.mrf.mxu0
        %v2228 = vadd.f32 0.0, %v2227
        %2229 = vmatmul.f32.gmra.mxu0 %v2103
        %v2230 = vpop.f32.mrf.mxu0
        %v2231 = vadd.f32 0.0, %v2230
        %2232 = vmatmul.f32.gmra.mxu0 %v2106
        %v2233 = vpop.f32.mrf.mxu0
        %v2234 = vadd.f32 0.0, %v2233
        %2235 = vmatmul.f32.gmra.mxu0 %v2109
        %v2236 = vpop.f32.mrf.mxu0
        %v2237 = vadd.f32 0.0, %v2236
        %2238 = vmatmul.f32.gmra.mxu0 %v2112
        %v2239 = vpop.f32.mrf.mxu0
        %v2240 = vadd.f32 0.0, %v2239
        %2241 = vmatmul.f32.gmra.mxu0 %v2115
        %v2242 = vpop.f32.mrf.mxu0
        %v2243 = vadd.f32 0.0, %v2242
        %2244 = vmatmul.f32.gmra.mxu0 %v2118
        %v2245 = vpop.f32.mrf.mxu0
        %v2246 = vadd.f32 0.0, %v2245
        %2247 = vmatmul.f32.gmra.mxu0 %v2121
        %v2248 = vpop.f32.mrf.mxu0
        %v2249 = vadd.f32 0.0, %v2248
        %2250 = vmatmul.f32.gmra.mxu0 %v2124
        %v2251 = vpop.f32.mrf.mxu0
        %v2252 = vadd.f32 0.0, %v2251
        %2253 = vmatmul.f32.gmra.mxu0 %v2127
        %v2254 = vpop.f32.mrf.mxu0
        %v2255 = vadd.f32 0.0, %v2254
        %2256 = vdwg.mxu0
        %v2257 = vadd.f32 %v1948, %v2150
        %v2258 = vadd.f32 %v1949, %v2153
        %v2259 = vadd.f32 %v1950, %v2156
        %v2260 = vadd.f32 %v1951, %v2159
        %v2261 = vadd.f32 %v1952, %v2162
        %v2262 = vadd.f32 %v1953, %v2165
        %v2263 = vadd.f32 %v1954, %v2168
        %v2264 = vadd.f32 %v1955, %v2171
        %v2265 = vadd.f32 %v1956, %v2174
        %v2266 = vadd.f32 %v1957, %v2177
        %v2267 = vadd.f32 %v1958, %v2180
        %v2268 = vadd.f32 %v1959, %v2183
        %v2269 = vadd.f32 %v1960, %v2186
        %v2270 = vadd.f32 %v1961, %v2189
        %v2271 = vadd.f32 %v1962, %v2192
        %v2272 = vadd.f32 %v1963, %v2195
        %v2273 = vadd.f32 %v1964, %v2198
        %v2274 = vadd.f32 %v1965, %v2201
        %v2275 = vadd.f32 %v1966, %v2204
        %v2276 = vadd.f32 %v1967, %v2207
        %v2277 = vadd.f32 %v1968, %v2210
        %v2278 = vadd.f32 %v1969, %v2213
        %v2279 = vadd.f32 %v1970, %v2216
        %v2280 = vadd.f32 %v1971, %v2219
        %v2281 = vadd.f32 %v1972, %v2222
        %v2282 = vadd.f32 %v1973, %v2225
        %v2283 = vadd.f32 %v1974, %v2228
        %v2284 = vadd.f32 %v1975, %v2231
        %v2285 = vadd.f32 %v1976, %v2234
        %v2286 = vadd.f32 %v1977, %v2237
        %v2287 = vadd.f32 %v1978, %v2240
        %v2288 = vadd.f32 %v1979, %v2243
        %v2289 = vadd.f32 %v1980, %v2246
        %v2290 = vadd.f32 %v1981, %v2249
        %v2291 = vadd.f32 %v1982, %v2252
        %v2292 = vadd.f32 %v1983, %v2255
        %v2293 = vld [vmem:[%s195 + $0x25] sm:$0xff]
        %v2294 = vld [vmem:[%s195 + $0x2d] sm:$0xff]
        %v2295 = vld [vmem:[%s195 + $0x35] sm:$0xff]
        %v2296 = vld [vmem:[%s195 + $0x3d] sm:$0xff]
        %v2297 = vld [vmem:[%s195 + $0x45] sm:$0xff]
        %v2298 = vld [vmem:[%s195 + $0x4d] sm:$0xff]
        %v2299 = vld [vmem:[%s195 + $0x55] sm:$0xff]
        %v2300 = vld [vmem:[%s195 + $0x5d] sm:$0xff]
        %v2301 = vld [vmem:[%s195 + $0x65] sm:$0xff]
        %v2302 = vld [vmem:[%s195 + $0x6d] sm:$0xff]
        %v2303 = vld [vmem:[%s195 + $0x75] sm:$0xff]
        %v2304 = vld [vmem:[%s195 + $0x7d] sm:$0xff]
        %v2305 = vld [vmem:[%s195 + $0x85] sm:$0xff]
        %v2306 = vld [vmem:[%s195 + $0x8d] sm:$0xff]
        %v2307 = vld [vmem:[%s195 + $0x95] sm:$0xff]
        %v2308 = vld [vmem:[%s195 + $0x9d] sm:$0xff]
        %v2309 = vld [vmem:[%s195 + $0xa5] sm:$0xff]
        %v2310 = vld [vmem:[%s195 + $0xad] sm:$0xff]
        %v2311 = vld [vmem:[%s195 + $0xb5] sm:$0xff]
        %v2312 = vld [vmem:[%s195 + $0xbd] sm:$0xff]
        %v2313 = vld [vmem:[%s195 + $0xc5] sm:$0xff]
        %v2314 = vld [vmem:[%s195 + $0xcd] sm:$0xff]
        %v2315 = vld [vmem:[%s195 + $0xd5] sm:$0xff]
        %v2316 = vld [vmem:[%s195 + $0xdd] sm:$0xff]
        %v2317 = vld [vmem:[%s195 + $0xe5] sm:$0xff]
        %v2318 = vld [vmem:[%s195 + $0xed] sm:$0xff]
        %v2319 = vld [vmem:[%s195 + $0xf5] sm:$0xff]
        %v2320 = vld [vmem:[%s195 + $0xfd] sm:$0xff]
        %v2321 = vld [vmem:[%s195 + $0x105] sm:$0xff]
        %v2322 = vld [vmem:[%s195 + $0x10d] sm:$0xff]
        %v2323 = vld [vmem:[%s195 + $0x115] sm:$0xff]
        %v2324 = vld [vmem:[%s195 + $0x11d] sm:$0xff]
        %v2325 = vld [vmem:[%s195 + $0x125] sm:$0xff]
        %v2326 = vld [vmem:[%s195 + $0x12d] sm:$0xff]
        %v2327 = vld [vmem:[%s195 + $0x135] sm:$0xff]
        %v2328 = vld [vmem:[%s195 + $0x13d] sm:$0xff]
        %v2329 = vld [vmem:[%s199 + $0x1c] sm:$0xf]
        %v2331 = vsel %vm274, %v2293, 0
        %v2334 = vsel %vm274, %v2294, 0
        %v2337 = vsel %vm274, %v2295, 0
        %v2340 = vsel %vm274, %v2296, 0
        %v2343 = vsel %vm274, %v2297, 0
        %v2346 = vsel %vm274, %v2298, 0
        %v2349 = vsel %vm274, %v2299, 0
        %v2352 = vsel %vm274, %v2300, 0
        %v2355 = vsel %vm274, %v2301, 0
        %v2358 = vsel %vm274, %v2302, 0
        %v2361 = vsel %vm274, %v2303, 0
        %v2364 = vsel %vm274, %v2304, 0
        %v2367 = vsel %vm274, %v2305, 0
        %v2370 = vsel %vm274, %v2306, 0
        %v2373 = vsel %vm274, %v2307, 0
        %v2376 = vsel %vm274, %v2308, 0
        %v2379 = vsel %vm274, %v2309, 0
        %v2382 = vsel %vm274, %v2310, 0
        %v2385 = vsel %vm274, %v2311, 0
        %v2388 = vsel %vm274, %v2312, 0
        %v2391 = vsel %vm274, %v2313, 0
        %v2394 = vsel %vm274, %v2314, 0
        %v2397 = vsel %vm274, %v2315, 0
        %v2400 = vsel %vm274, %v2316, 0
        %v2403 = vsel %vm274, %v2317, 0
        %v2406 = vsel %vm274, %v2318, 0
        %v2409 = vsel %vm274, %v2319, 0
        %v2412 = vsel %vm274, %v2320, 0
        %v2415 = vsel %vm274, %v2321, 0
        %v2418 = vsel %vm274, %v2322, 0
        %v2421 = vsel %vm274, %v2323, 0
        %v2424 = vsel %vm274, %v2324, 0
        %v2427 = vsel %vm274, %v2325, 0
        %v2430 = vsel %vm274, %v2326, 0
        %v2433 = vsel %vm274, %v2327, 0
        %v2436 = vsel %vm274, %v2328, 0
        %v2439 = vsel %vm383, %v2329, 0
        %2441 = vmatpush.msra.mxu0 0.0
        %2442 = vmatpush.msra.mxu0 0.0
        %2443 = vmatpush.msra.mxu0 0.0
        %2444 = vmatpush.msra.mxu0 0.0
        %2445 = vmatpush.msra.mxu0 0.0
        %2446 = vmatpush.msra.mxu0 0.0
        %2447 = vmatpush.msra.mxu0 0.0
        %2448 = vmatpush.msra.mxu0 0.0
        %2449 = vmatpush.msra.mxu0 0.0
        %2450 = vmatpush.msra.mxu0 0.0
        %2451 = vmatpush.msra.mxu0 0.0
        %2452 = vmatpush.msra.mxu0 0.0
        %2453 = vmatpush.msra.mxu0 0.0
        %2454 = vmatpush.msra.mxu0 0.0
        %2455 = vmatpush.msra.mxu0 0.0
        %2456 = vmatpush.msra.mxu0 %v2439
        %2457 = vmatmul.f32.gmra.mxu0 %v2331
        %v2458 = vpop.f32.mrf.mxu0
        %v2459 = vadd.f32 0.0, %v2458
        %2460 = vmatmul.f32.gmra.mxu0 %v2334
        %v2461 = vpop.f32.mrf.mxu0
        %v2462 = vadd.f32 0.0, %v2461
        %2463 = vmatmul.f32.gmra.mxu0 %v2337
        %v2464 = vpop.f32.mrf.mxu0
        %v2465 = vadd.f32 0.0, %v2464
        %2466 = vmatmul.f32.gmra.mxu0 %v2340
        %v2467 = vpop.f32.mrf.mxu0
        %v2468 = vadd.f32 0.0, %v2467
        %2469 = vmatmul.f32.gmra.mxu0 %v2343
        %v2470 = vpop.f32.mrf.mxu0
        %v2471 = vadd.f32 0.0, %v2470
        %2472 = vmatmul.f32.gmra.mxu0 %v2346
        %v2473 = vpop.f32.mrf.mxu0
        %v2474 = vadd.f32 0.0, %v2473
        %2475 = vmatmul.f32.gmra.mxu0 %v2349
        %v2476 = vpop.f32.mrf.mxu0
        %v2477 = vadd.f32 0.0, %v2476
        %2478 = vmatmul.f32.gmra.mxu0 %v2352
        %v2479 = vpop.f32.mrf.mxu0
        %v2480 = vadd.f32 0.0, %v2479
        %2481 = vmatmul.f32.gmra.mxu0 %v2355
        %v2482 = vpop.f32.mrf.mxu0
        %v2483 = vadd.f32 0.0, %v2482
        %2484 = vmatmul.f32.gmra.mxu0 %v2358
        %v2485 = vpop.f32.mrf.mxu0
        %v2486 = vadd.f32 0.0, %v2485
        %2487 = vmatmul.f32.gmra.mxu0 %v2361
        %v2488 = vpop.f32.mrf.mxu0
        %v2489 = vadd.f32 0.0, %v2488
        %2490 = vmatmul.f32.gmra.mxu0 %v2364
        %v2491 = vpop.f32.mrf.mxu0
        %v2492 = vadd.f32 0.0, %v2491
        %2493 = vmatmul.f32.gmra.mxu0 %v2367
        %v2494 = vpop.f32.mrf.mxu0
        %v2495 = vadd.f32 0.0, %v2494
        %2496 = vmatmul.f32.gmra.mxu0 %v2370
        %v2497 = vpop.f32.mrf.mxu0
        %v2498 = vadd.f32 0.0, %v2497
        %2499 = vmatmul.f32.gmra.mxu0 %v2373
        %v2500 = vpop.f32.mrf.mxu0
        %v2501 = vadd.f32 0.0, %v2500
        %2502 = vmatmul.f32.gmra.mxu0 %v2376
        %v2503 = vpop.f32.mrf.mxu0
        %v2504 = vadd.f32 0.0, %v2503
        %2505 = vmatmul.f32.gmra.mxu0 %v2379
        %v2506 = vpop.f32.mrf.mxu0
        %v2507 = vadd.f32 0.0, %v2506
        %2508 = vmatmul.f32.gmra.mxu0 %v2382
        %v2509 = vpop.f32.mrf.mxu0
        %v2510 = vadd.f32 0.0, %v2509
        %2511 = vmatmul.f32.gmra.mxu0 %v2385
        %v2512 = vpop.f32.mrf.mxu0
        %v2513 = vadd.f32 0.0, %v2512
        %2514 = vmatmul.f32.gmra.mxu0 %v2388
        %v2515 = vpop.f32.mrf.mxu0
        %v2516 = vadd.f32 0.0, %v2515
        %2517 = vmatmul.f32.gmra.mxu0 %v2391
        %v2518 = vpop.f32.mrf.mxu0
        %v2519 = vadd.f32 0.0, %v2518
        %2520 = vmatmul.f32.gmra.mxu0 %v2394
        %v2521 = vpop.f32.mrf.mxu0
        %v2522 = vadd.f32 0.0, %v2521
        %2523 = vmatmul.f32.gmra.mxu0 %v2397
        %v2524 = vpop.f32.mrf.mxu0
        %v2525 = vadd.f32 0.0, %v2524
        %2526 = vmatmul.f32.gmra.mxu0 %v2400
        %v2527 = vpop.f32.mrf.mxu0
        %v2528 = vadd.f32 0.0, %v2527
        %2529 = vmatmul.f32.gmra.mxu0 %v2403
        %v2530 = vpop.f32.mrf.mxu0
        %v2531 = vadd.f32 0.0, %v2530
        %2532 = vmatmul.f32.gmra.mxu0 %v2406
        %v2533 = vpop.f32.mrf.mxu0
        %v2534 = vadd.f32 0.0, %v2533
        %2535 = vmatmul.f32.gmra.mxu0 %v2409
        %v2536 = vpop.f32.mrf.mxu0
        %v2537 = vadd.f32 0.0, %v2536
        %2538 = vmatmul.f32.gmra.mxu0 %v2412
        %v2539 = vpop.f32.mrf.mxu0
        %v2540 = vadd.f32 0.0, %v2539
        %2541 = vmatmul.f32.gmra.mxu0 %v2415
        %v2542 = vpop.f32.mrf.mxu0
        %v2543 = vadd.f32 0.0, %v2542
        %2544 = vmatmul.f32.gmra.mxu0 %v2418
        %v2545 = vpop.f32.mrf.mxu0
        %v2546 = vadd.f32 0.0, %v2545
        %2547 = vmatmul.f32.gmra.mxu0 %v2421
        %v2548 = vpop.f32.mrf.mxu0
        %v2549 = vadd.f32 0.0, %v2548
        %2550 = vmatmul.f32.gmra.mxu0 %v2424
        %v2551 = vpop.f32.mrf.mxu0
        %v2552 = vadd.f32 0.0, %v2551
        %2553 = vmatmul.f32.gmra.mxu0 %v2427
        %v2554 = vpop.f32.mrf.mxu0
        %v2555 = vadd.f32 0.0, %v2554
        %2556 = vmatmul.f32.gmra.mxu0 %v2430
        %v2557 = vpop.f32.mrf.mxu0
        %v2558 = vadd.f32 0.0, %v2557
        %2559 = vmatmul.f32.gmra.mxu0 %v2433
        %v2560 = vpop.f32.mrf.mxu0
        %v2561 = vadd.f32 0.0, %v2560
        %2562 = vmatmul.f32.gmra.mxu0 %v2436
        %v2563 = vpop.f32.mrf.mxu0
        %v2564 = vadd.f32 0.0, %v2563
        %2565 = vdwg.mxu0
        %v2566 = vadd.f32 %v2257, %v2459
        %v2567 = vadd.f32 %v2258, %v2462
        %v2568 = vadd.f32 %v2259, %v2465
        %v2569 = vadd.f32 %v2260, %v2468
        %v2570 = vadd.f32 %v2261, %v2471
        %v2571 = vadd.f32 %v2262, %v2474
        %v2572 = vadd.f32 %v2263, %v2477
        %v2573 = vadd.f32 %v2264, %v2480
        %v2574 = vadd.f32 %v2265, %v2483
        %v2575 = vadd.f32 %v2266, %v2486
        %v2576 = vadd.f32 %v2267, %v2489
        %v2577 = vadd.f32 %v2268, %v2492
        %v2578 = vadd.f32 %v2269, %v2495
        %v2579 = vadd.f32 %v2270, %v2498
        %v2580 = vadd.f32 %v2271, %v2501
        %v2581 = vadd.f32 %v2272, %v2504
        %v2582 = vadd.f32 %v2273, %v2507
        %v2583 = vadd.f32 %v2274, %v2510
        %v2584 = vadd.f32 %v2275, %v2513
        %v2585 = vadd.f32 %v2276, %v2516
        %v2586 = vadd.f32 %v2277, %v2519
        %v2587 = vadd.f32 %v2278, %v2522
        %v2588 = vadd.f32 %v2279, %v2525
        %v2589 = vadd.f32 %v2280, %v2528
        %v2590 = vadd.f32 %v2281, %v2531
        %v2591 = vadd.f32 %v2282, %v2534
        %v2592 = vadd.f32 %v2283, %v2537
        %v2593 = vadd.f32 %v2284, %v2540
        %v2594 = vadd.f32 %v2285, %v2543
        %v2595 = vadd.f32 %v2286, %v2546
        %v2596 = vadd.f32 %v2287, %v2549
        %v2597 = vadd.f32 %v2288, %v2552
        %v2598 = vadd.f32 %v2289, %v2555
        %v2599 = vadd.f32 %v2290, %v2558
        %v2600 = vadd.f32 %v2291, %v2561
        %v2601 = vadd.f32 %v2292, %v2564
        %v2602 = vld [vmem:[%s195 + $0x26] sm:$0xff]
        %v2603 = vld [vmem:[%s195 + $0x2e] sm:$0xff]
        %v2604 = vld [vmem:[%s195 + $0x36] sm:$0xff]
        %v2605 = vld [vmem:[%s195 + $0x3e] sm:$0xff]
        %v2606 = vld [vmem:[%s195 + $0x46] sm:$0xff]
        %v2607 = vld [vmem:[%s195 + $0x4e] sm:$0xff]
        %v2608 = vld [vmem:[%s195 + $0x56] sm:$0xff]
        %v2609 = vld [vmem:[%s195 + $0x5e] sm:$0xff]
        %v2610 = vld [vmem:[%s195 + $0x66] sm:$0xff]
        %v2611 = vld [vmem:[%s195 + $0x6e] sm:$0xff]
        %v2612 = vld [vmem:[%s195 + $0x76] sm:$0xff]
        %v2613 = vld [vmem:[%s195 + $0x7e] sm:$0xff]
        %v2614 = vld [vmem:[%s195 + $0x86] sm:$0xff]
        %v2615 = vld [vmem:[%s195 + $0x8e] sm:$0xff]
        %v2616 = vld [vmem:[%s195 + $0x96] sm:$0xff]
        %v2617 = vld [vmem:[%s195 + $0x9e] sm:$0xff]
        %v2618 = vld [vmem:[%s195 + $0xa6] sm:$0xff]
        %v2619 = vld [vmem:[%s195 + $0xae] sm:$0xff]
        %v2620 = vld [vmem:[%s195 + $0xb6] sm:$0xff]
        %v2621 = vld [vmem:[%s195 + $0xbe] sm:$0xff]
        %v2622 = vld [vmem:[%s195 + $0xc6] sm:$0xff]
        %v2623 = vld [vmem:[%s195 + $0xce] sm:$0xff]
        %v2624 = vld [vmem:[%s195 + $0xd6] sm:$0xff]
        %v2625 = vld [vmem:[%s195 + $0xde] sm:$0xff]
        %v2626 = vld [vmem:[%s195 + $0xe6] sm:$0xff]
        %v2627 = vld [vmem:[%s195 + $0xee] sm:$0xff]
        %v2628 = vld [vmem:[%s195 + $0xf6] sm:$0xff]
        %v2629 = vld [vmem:[%s195 + $0xfe] sm:$0xff]
        %v2630 = vld [vmem:[%s195 + $0x106] sm:$0xff]
        %v2631 = vld [vmem:[%s195 + $0x10e] sm:$0xff]
        %v2632 = vld [vmem:[%s195 + $0x116] sm:$0xff]
        %v2633 = vld [vmem:[%s195 + $0x11e] sm:$0xff]
        %v2634 = vld [vmem:[%s195 + $0x126] sm:$0xff]
        %v2635 = vld [vmem:[%s195 + $0x12e] sm:$0xff]
        %v2636 = vld [vmem:[%s195 + $0x136] sm:$0xff]
        %v2637 = vld [vmem:[%s195 + $0x13e] sm:$0xff]
        %v2638 = vld [vmem:[%s199 + $0x20] sm:$0xf]
        %v2640 = vsel %vm274, %v2602, 0
        %v2643 = vsel %vm274, %v2603, 0
        %v2646 = vsel %vm274, %v2604, 0
        %v2649 = vsel %vm274, %v2605, 0
        %v2652 = vsel %vm274, %v2606, 0
        %v2655 = vsel %vm274, %v2607, 0
        %v2658 = vsel %vm274, %v2608, 0
        %v2661 = vsel %vm274, %v2609, 0
        %v2664 = vsel %vm274, %v2610, 0
        %v2667 = vsel %vm274, %v2611, 0
        %v2670 = vsel %vm274, %v2612, 0
        %v2673 = vsel %vm274, %v2613, 0
        %v2676 = vsel %vm274, %v2614, 0
        %v2679 = vsel %vm274, %v2615, 0
        %v2682 = vsel %vm274, %v2616, 0
        %v2685 = vsel %vm274, %v2617, 0
        %v2688 = vsel %vm274, %v2618, 0
        %v2691 = vsel %vm274, %v2619, 0
        %v2694 = vsel %vm274, %v2620, 0
        %v2697 = vsel %vm274, %v2621, 0
        %v2700 = vsel %vm274, %v2622, 0
        %v2703 = vsel %vm274, %v2623, 0
        %v2706 = vsel %vm274, %v2624, 0
        %v2709 = vsel %vm274, %v2625, 0
        %v2712 = vsel %vm274, %v2626, 0
        %v2715 = vsel %vm274, %v2627, 0
        %v2718 = vsel %vm274, %v2628, 0
        %v2721 = vsel %vm274, %v2629, 0
        %v2724 = vsel %vm274, %v2630, 0
        %v2727 = vsel %vm274, %v2631, 0
        %v2730 = vsel %vm274, %v2632, 0
        %v2733 = vsel %vm274, %v2633, 0
        %v2736 = vsel %vm274, %v2634, 0
        %v2739 = vsel %vm274, %v2635, 0
        %v2742 = vsel %vm274, %v2636, 0
        %v2745 = vsel %vm274, %v2637, 0
        %v2748 = vsel %vm383, %v2638, 0
        %2750 = vmatpush.msra.mxu0 0.0
        %2751 = vmatpush.msra.mxu0 0.0
        %2752 = vmatpush.msra.mxu0 0.0
        %2753 = vmatpush.msra.mxu0 0.0
        %2754 = vmatpush.msra.mxu0 0.0
        %2755 = vmatpush.msra.mxu0 0.0
        %2756 = vmatpush.msra.mxu0 0.0
        %2757 = vmatpush.msra.mxu0 0.0
        %2758 = vmatpush.msra.mxu0 0.0
        %2759 = vmatpush.msra.mxu0 0.0
        %2760 = vmatpush.msra.mxu0 0.0
        %2761 = vmatpush.msra.mxu0 0.0
        %2762 = vmatpush.msra.mxu0 0.0
        %2763 = vmatpush.msra.mxu0 0.0
        %2764 = vmatpush.msra.mxu0 0.0
        %2765 = vmatpush.msra.mxu0 %v2748
        %2766 = vmatmul.f32.gmra.mxu0 %v2640
        %v2767 = vpop.f32.mrf.mxu0
        %v2768 = vadd.f32 0.0, %v2767
        %2769 = vmatmul.f32.gmra.mxu0 %v2643
        %v2770 = vpop.f32.mrf.mxu0
        %v2771 = vadd.f32 0.0, %v2770
        %2772 = vmatmul.f32.gmra.mxu0 %v2646
        %v2773 = vpop.f32.mrf.mxu0
        %v2774 = vadd.f32 0.0, %v2773
        %2775 = vmatmul.f32.gmra.mxu0 %v2649
        %v2776 = vpop.f32.mrf.mxu0
        %v2777 = vadd.f32 0.0, %v2776
        %2778 = vmatmul.f32.gmra.mxu0 %v2652
        %v2779 = vpop.f32.mrf.mxu0
        %v2780 = vadd.f32 0.0, %v2779
        %2781 = vmatmul.f32.gmra.mxu0 %v2655
        %v2782 = vpop.f32.mrf.mxu0
        %v2783 = vadd.f32 0.0, %v2782
        %2784 = vmatmul.f32.gmra.mxu0 %v2658
        %v2785 = vpop.f32.mrf.mxu0
        %v2786 = vadd.f32 0.0, %v2785
        %2787 = vmatmul.f32.gmra.mxu0 %v2661
        %v2788 = vpop.f32.mrf.mxu0
        %v2789 = vadd.f32 0.0, %v2788
        %2790 = vmatmul.f32.gmra.mxu0 %v2664
        %v2791 = vpop.f32.mrf.mxu0
        %v2792 = vadd.f32 0.0, %v2791
        %2793 = vmatmul.f32.gmra.mxu0 %v2667
        %v2794 = vpop.f32.mrf.mxu0
        %v2795 = vadd.f32 0.0, %v2794
        %2796 = vmatmul.f32.gmra.mxu0 %v2670
        %v2797 = vpop.f32.mrf.mxu0
        %v2798 = vadd.f32 0.0, %v2797
        %2799 = vmatmul.f32.gmra.mxu0 %v2673
        %v2800 = vpop.f32.mrf.mxu0
        %v2801 = vadd.f32 0.0, %v2800
        %2802 = vmatmul.f32.gmra.mxu0 %v2676
        %v2803 = vpop.f32.mrf.mxu0
        %v2804 = vadd.f32 0.0, %v2803
        %2805 = vmatmul.f32.gmra.mxu0 %v2679
        %v2806 = vpop.f32.mrf.mxu0
        %v2807 = vadd.f32 0.0, %v2806
        %2808 = vmatmul.f32.gmra.mxu0 %v2682
        %v2809 = vpop.f32.mrf.mxu0
        %v2810 = vadd.f32 0.0, %v2809
        %2811 = vmatmul.f32.gmra.mxu0 %v2685
        %v2812 = vpop.f32.mrf.mxu0
        %v2813 = vadd.f32 0.0, %v2812
        %2814 = vmatmul.f32.gmra.mxu0 %v2688
        %v2815 = vpop.f32.mrf.mxu0
        %v2816 = vadd.f32 0.0, %v2815
        %2817 = vmatmul.f32.gmra.mxu0 %v2691
        %v2818 = vpop.f32.mrf.mxu0
        %v2819 = vadd.f32 0.0, %v2818
        %2820 = vmatmul.f32.gmra.mxu0 %v2694
        %v2821 = vpop.f32.mrf.mxu0
        %v2822 = vadd.f32 0.0, %v2821
        %2823 = vmatmul.f32.gmra.mxu0 %v2697
        %v2824 = vpop.f32.mrf.mxu0
        %v2825 = vadd.f32 0.0, %v2824
        %2826 = vmatmul.f32.gmra.mxu0 %v2700
        %v2827 = vpop.f32.mrf.mxu0
        %v2828 = vadd.f32 0.0, %v2827
        %2829 = vmatmul.f32.gmra.mxu0 %v2703
        %v2830 = vpop.f32.mrf.mxu0
        %v2831 = vadd.f32 0.0, %v2830
        %2832 = vmatmul.f32.gmra.mxu0 %v2706
        %v2833 = vpop.f32.mrf.mxu0
        %v2834 = vadd.f32 0.0, %v2833
        %2835 = vmatmul.f32.gmra.mxu0 %v2709
        %v2836 = vpop.f32.mrf.mxu0
        %v2837 = vadd.f32 0.0, %v2836
        %2838 = vmatmul.f32.gmra.mxu0 %v2712
        %v2839 = vpop.f32.mrf.mxu0
        %v2840 = vadd.f32 0.0, %v2839
        %2841 = vmatmul.f32.gmra.mxu0 %v2715
        %v2842 = vpop.f32.mrf.mxu0
        %v2843 = vadd.f32 0.0, %v2842
        %2844 = vmatmul.f32.gmra.mxu0 %v2718
        %v2845 = vpop.f32.mrf.mxu0
        %v2846 = vadd.f32 0.0, %v2845
        %2847 = vmatmul.f32.gmra.mxu0 %v2721
        %v2848 = vpop.f32.mrf.mxu0
        %v2849 = vadd.f32 0.0, %v2848
        %2850 = vmatmul.f32.gmra.mxu0 %v2724
        %v2851 = vpop.f32.mrf.mxu0
        %v2852 = vadd.f32 0.0, %v2851
        %2853 = vmatmul.f32.gmra.mxu0 %v2727
        %v2854 = vpop.f32.mrf.mxu0
        %v2855 = vadd.f32 0.0, %v2854
        %2856 = vmatmul.f32.gmra.mxu0 %v2730
        %v2857 = vpop.f32.mrf.mxu0
        %v2858 = vadd.f32 0.0, %v2857
        %2859 = vmatmul.f32.gmra.mxu0 %v2733
        %v2860 = vpop.f32.mrf.mxu0
        %v2861 = vadd.f32 0.0, %v2860
        %2862 = vmatmul.f32.gmra.mxu0 %v2736
        %v2863 = vpop.f32.mrf.mxu0
        %v2864 = vadd.f32 0.0, %v2863
        %2865 = vmatmul.f32.gmra.mxu0 %v2739
        %v2866 = vpop.f32.mrf.mxu0
        %v2867 = vadd.f32 0.0, %v2866
        %2868 = vmatmul.f32.gmra.mxu0 %v2742
        %v2869 = vpop.f32.mrf.mxu0
        %v2870 = vadd.f32 0.0, %v2869
        %2871 = vmatmul.f32.gmra.mxu0 %v2745
        %v2872 = vpop.f32.mrf.mxu0
        %v2873 = vadd.f32 0.0, %v2872
        %2874 = vdwg.mxu0
        %v2875 = vadd.f32 %v2566, %v2768
        %v2876 = vadd.f32 %v2567, %v2771
        %v2877 = vadd.f32 %v2568, %v2774
        %v2878 = vadd.f32 %v2569, %v2777
        %v2879 = vadd.f32 %v2570, %v2780
        %v2880 = vadd.f32 %v2571, %v2783
        %v2881 = vadd.f32 %v2572, %v2786
        %v2882 = vadd.f32 %v2573, %v2789
        %v2883 = vadd.f32 %v2574, %v2792
        %v2884 = vadd.f32 %v2575, %v2795
        %v2885 = vadd.f32 %v2576, %v2798
        %v2886 = vadd.f32 %v2577, %v2801
        %v2887 = vadd.f32 %v2578, %v2804
        %v2888 = vadd.f32 %v2579, %v2807
        %v2889 = vadd.f32 %v2580, %v2810
        %v2890 = vadd.f32 %v2581, %v2813
        %v2891 = vadd.f32 %v2582, %v2816
        %v2892 = vadd.f32 %v2583, %v2819
        %v2893 = vadd.f32 %v2584, %v2822
        %v2894 = vadd.f32 %v2585, %v2825
        %v2895 = vadd.f32 %v2586, %v2828
        %v2896 = vadd.f32 %v2587, %v2831
        %v2897 = vadd.f32 %v2588, %v2834
        %v2898 = vadd.f32 %v2589, %v2837
        %v2899 = vadd.f32 %v2590, %v2840
        %v2900 = vadd.f32 %v2591, %v2843
        %v2901 = vadd.f32 %v2592, %v2846
        %v2902 = vadd.f32 %v2593, %v2849
        %v2903 = vadd.f32 %v2594, %v2852
        %v2904 = vadd.f32 %v2595, %v2855
        %v2905 = vadd.f32 %v2596, %v2858
        %v2906 = vadd.f32 %v2597, %v2861
        %v2907 = vadd.f32 %v2598, %v2864
        %v2908 = vadd.f32 %v2599, %v2867
        %v2909 = vadd.f32 %v2600, %v2870
        %v2910 = vadd.f32 %v2601, %v2873
        %v2911 = vld [vmem:[%s2] sm:$0xff]
        %v2912 = vld [vmem:[%s2 + $0x8] sm:$0xff]
        %v2913 = vld [vmem:[%s2 + $0x10] sm:$0xff]
        %v2914 = vld [vmem:[%s2 + $0x18] sm:$0xff]
        %v2915 = vld [vmem:[%s2 + $0x20] sm:$0xff]
        %v2916 = vld [vmem:[%s2 + $0x28] sm:$0xff]
        %v2917 = vld [vmem:[%s2 + $0x30] sm:$0xff]
        %v2918 = vld [vmem:[%s2 + $0x38] sm:$0xff]
        %v2919 = vld [vmem:[%s2 + $0x40] sm:$0xff]
        %v2920 = vld [vmem:[%s2 + $0x48] sm:$0xff]
        %v2921 = vld [vmem:[%s2 + $0x50] sm:$0xff]
        %v2922 = vld [vmem:[%s2 + $0x58] sm:$0xff]
        %v2923 = vld [vmem:[%s2 + $0x60] sm:$0xff]
        %v2924 = vld [vmem:[%s2 + $0x68] sm:$0xff]
        %v2925 = vld [vmem:[%s2 + $0x70] sm:$0xff]
        %v2926 = vld [vmem:[%s2 + $0x78] sm:$0xff]
        %v2927 = vld [vmem:[%s2 + $0x80] sm:$0xff]
        %v2928 = vld [vmem:[%s2 + $0x88] sm:$0xff]
        %v2929 = vld [vmem:[%s2 + $0x90] sm:$0xff]
        %v2930 = vld [vmem:[%s2 + $0x98] sm:$0xff]
        %v2931 = vld [vmem:[%s2 + $0xa0] sm:$0xff]
        %v2932 = vld [vmem:[%s2 + $0xa8] sm:$0xff]
        %v2933 = vld [vmem:[%s2 + $0xb0] sm:$0xff]
        %v2934 = vld [vmem:[%s2 + $0xb8] sm:$0xff]
        %v2935 = vld [vmem:[%s2 + $0xc0] sm:$0xff]
        %v2936 = vld [vmem:[%s2 + $0xc8] sm:$0xff]
        %v2937 = vld [vmem:[%s2 + $0xd0] sm:$0xff]
        %v2938 = vld [vmem:[%s2 + $0xd8] sm:$0xff]
        %v2939 = vld [vmem:[%s2 + $0xe0] sm:$0xff]
        %v2940 = vld [vmem:[%s2 + $0xe8] sm:$0xff]
        %v2941 = vld [vmem:[%s2 + $0xf0] sm:$0xff]
        %v2942 = vld [vmem:[%s2 + $0xf8] sm:$0xff]
        %v2943 = vld [vmem:[%s2 + $0x100] sm:$0xff]
        %v2944 = vld [vmem:[%s2 + $0x108] sm:$0xff]
        %v2945 = vld [vmem:[%s2 + $0x110] sm:$0xff]
        %v2946 = vld [vmem:[%s2 + $0x118] sm:$0xff]
        %2948 = vset.pattern.permute.xlu0 0
        %2949 = vperm.xlu0 %2948, %v2911
        %v2950 = vpop.permute.xlu0 %2949
        %2953 = vset.pattern.permute.xlu0 0
        %2954 = vperm.xlu0 %2953, %v2912
        %v2955 = vpop.permute.xlu0 %2954
        %2958 = vset.pattern.permute.xlu0 0
        %2959 = vperm.xlu0 %2958, %v2913
        %v2960 = vpop.permute.xlu0 %2959
        %2963 = vset.pattern.permute.xlu0 0
        %2964 = vperm.xlu0 %2963, %v2914
        %v2965 = vpop.permute.xlu0 %2964
        %2968 = vset.pattern.permute.xlu0 0
        %2969 = vperm.xlu0 %2968, %v2915
        %v2970 = vpop.permute.xlu0 %2969
        %2973 = vset.pattern.permute.xlu0 0
        %2974 = vperm.xlu0 %2973, %v2916
        %v2975 = vpop.permute.xlu0 %2974
        %2978 = vset.pattern.permute.xlu0 0
        %2979 = vperm.xlu0 %2978, %v2917
        %v2980 = vpop.permute.xlu0 %2979
        %2983 = vset.pattern.permute.xlu0 0
        %2984 = vperm.xlu0 %2983, %v2918
        %v2985 = vpop.permute.xlu0 %2984
        %2988 = vset.pattern.permute.xlu0 0
        %2989 = vperm.xlu0 %2988, %v2919
        %v2990 = vpop.permute.xlu0 %2989
        %2993 = vset.pattern.permute.xlu0 0
        %2994 = vperm.xlu0 %2993, %v2920
        %v2995 = vpop.permute.xlu0 %2994
        %2998 = vset.pattern.permute.xlu0 0
        %2999 = vperm.xlu0 %2998, %v2921
        %v3000 = vpop.permute.xlu0 %2999
        %3003 = vset.pattern.permute.xlu0 0
        %3004 = vperm.xlu0 %3003, %v2922
        %v3005 = vpop.permute.xlu0 %3004
        %3008 = vset.pattern.permute.xlu0 0
        %3009 = vperm.xlu0 %3008, %v2923
        %v3010 = vpop.permute.xlu0 %3009
        %3013 = vset.pattern.permute.xlu0 0
        %3014 = vperm.xlu0 %3013, %v2924
        %v3015 = vpop.permute.xlu0 %3014
        %3018 = vset.pattern.permute.xlu0 0
        %3019 = vperm.xlu0 %3018, %v2925
        %v3020 = vpop.permute.xlu0 %3019
        %3023 = vset.pattern.permute.xlu0 0
        %3024 = vperm.xlu0 %3023, %v2926
        %v3025 = vpop.permute.xlu0 %3024
        %3028 = vset.pattern.permute.xlu0 0
        %3029 = vperm.xlu0 %3028, %v2927
        %v3030 = vpop.permute.xlu0 %3029
        %3033 = vset.pattern.permute.xlu0 0
        %3034 = vperm.xlu0 %3033, %v2928
        %v3035 = vpop.permute.xlu0 %3034
        %3038 = vset.pattern.permute.xlu0 0
        %3039 = vperm.xlu0 %3038, %v2929
        %v3040 = vpop.permute.xlu0 %3039
        %3043 = vset.pattern.permute.xlu0 0
        %3044 = vperm.xlu0 %3043, %v2930
        %v3045 = vpop.permute.xlu0 %3044
        %3048 = vset.pattern.permute.xlu0 0
        %3049 = vperm.xlu0 %3048, %v2931
        %v3050 = vpop.permute.xlu0 %3049
        %3053 = vset.pattern.permute.xlu0 0
        %3054 = vperm.xlu0 %3053, %v2932
        %v3055 = vpop.permute.xlu0 %3054
        %3058 = vset.pattern.permute.xlu0 0
        %3059 = vperm.xlu0 %3058, %v2933
        %v3060 = vpop.permute.xlu0 %3059
        %3063 = vset.pattern.permute.xlu0 0
        %3064 = vperm.xlu0 %3063, %v2934
        %v3065 = vpop.permute.xlu0 %3064
        %3068 = vset.pattern.permute.xlu0 0
        %3069 = vperm.xlu0 %3068, %v2935
        %v3070 = vpop.permute.xlu0 %3069
        %3073 = vset.pattern.permute.xlu0 0
        %3074 = vperm.xlu0 %3073, %v2936
        %v3075 = vpop.permute.xlu0 %3074
        %3078 = vset.pattern.permute.xlu0 0
        %3079 = vperm.xlu0 %3078, %v2937
        %v3080 = vpop.permute.xlu0 %3079
        %3083 = vset.pattern.permute.xlu0 0
        %3084 = vperm.xlu0 %3083, %v2938
        %v3085 = vpop.permute.xlu0 %3084
        %3088 = vset.pattern.permute.xlu0 0
        %3089 = vperm.xlu0 %3088, %v2939
        %v3090 = vpop.permute.xlu0 %3089
        %3093 = vset.pattern.permute.xlu0 0
        %3094 = vperm.xlu0 %3093, %v2940
        %v3095 = vpop.permute.xlu0 %3094
        %3098 = vset.pattern.permute.xlu0 0
        %3099 = vperm.xlu0 %3098, %v2941
        %v3100 = vpop.permute.xlu0 %3099
        %3103 = vset.pattern.permute.xlu0 0
        %3104 = vperm.xlu0 %3103, %v2942
        %v3105 = vpop.permute.xlu0 %3104
        %3108 = vset.pattern.permute.xlu0 0
        %3109 = vperm.xlu0 %3108, %v2943
        %v3110 = vpop.permute.xlu0 %3109
        %3113 = vset.pattern.permute.xlu0 0
        %3114 = vperm.xlu0 %3113, %v2944
        %v3115 = vpop.permute.xlu0 %3114
        %3118 = vset.pattern.permute.xlu0 0
        %3119 = vperm.xlu0 %3118, %v2945
        %v3120 = vpop.permute.xlu0 %3119
        %3123 = vset.pattern.permute.xlu0 0
        %3124 = vperm.xlu0 %3123, %v2946
        %v3125 = vpop.permute.xlu0 %3124
        %v3127 = vmul.f32 %v2875, %v2950
        %v3128 = vmul.f32 %v2876, %v2955
        %v3129 = vmul.f32 %v2877, %v2960
        %v3130 = vmul.f32 %v2878, %v2965
        %v3131 = vmul.f32 %v2879, %v2970
        %v3132 = vmul.f32 %v2880, %v2975
        %v3133 = vmul.f32 %v2881, %v2980
        %v3134 = vmul.f32 %v2882, %v2985
        %v3135 = vmul.f32 %v2883, %v2990
        %v3136 = vmul.f32 %v2884, %v2995
        %v3137 = vmul.f32 %v2885, %v3000
        %v3138 = vmul.f32 %v2886, %v3005
        %v3139 = vmul.f32 %v2887, %v3010
        %v3140 = vmul.f32 %v2888, %v3015
        %v3141 = vmul.f32 %v2889, %v3020
        %v3142 = vmul.f32 %v2890, %v3025
        %v3143 = vmul.f32 %v2891, %v3030
        %v3144 = vmul.f32 %v2892, %v3035
        %v3145 = vmul.f32 %v2893, %v3040
        %v3146 = vmul.f32 %v2894, %v3045
        %v3147 = vmul.f32 %v2895, %v3050
        %v3148 = vmul.f32 %v2896, %v3055
        %v3149 = vmul.f32 %v2897, %v3060
        %v3150 = vmul.f32 %v2898, %v3065
        %v3151 = vmul.f32 %v2899, %v3070
        %v3152 = vmul.f32 %v2900, %v3075
        %v3153 = vmul.f32 %v2901, %v3080
        %v3154 = vmul.f32 %v2902, %v3085
        %v3155 = vmul.f32 %v2903, %v3090
        %v3156 = vmul.f32 %v2904, %v3095
        %v3157 = vmul.f32 %v2905, %v3100
        %v3158 = vmul.f32 %v2906, %v3105
        %v3159 = vmul.f32 %v2907, %v3110
        %v3160 = vmul.f32 %v2908, %v3115
        %v3161 = vmul.f32 %v2909, %v3120
        %v3162 = vmul.f32 %v2910, %v3125
        %v3163 = vadd.f32 %v3127, %v3128
        %v3164 = vadd.f32 %v3163, %v3129
        %v3165 = vadd.f32 %v3164, %v3130
        %v3166 = vadd.f32 %v3165, %v3131
        %v3167 = vadd.f32 %v3166, %v3132
        %v3168 = vadd.f32 %v3167, %v3133
        %v3169 = vadd.f32 %v3168, %v3134
        %v3170 = vadd.f32 %v3169, %v3135
        %v3171 = vadd.f32 %v3170, %v3136
        %v3172 = vadd.f32 %v3171, %v3137
        %v3173 = vadd.f32 %v3172, %v3138
        %v3174 = vadd.f32 %v3173, %v3139
        %v3175 = vadd.f32 %v3174, %v3140
        %v3176 = vadd.f32 %v3175, %v3141
        %v3177 = vadd.f32 %v3176, %v3142
        %v3178 = vadd.f32 %v3177, %v3143
        %v3179 = vadd.f32 %v3178, %v3144
        %v3180 = vadd.f32 %v3179, %v3145
        %v3181 = vadd.f32 %v3180, %v3146
        %v3182 = vadd.f32 %v3181, %v3147
        %v3183 = vadd.f32 %v3182, %v3148
        %v3184 = vadd.f32 %v3183, %v3149
        %v3185 = vadd.f32 %v3184, %v3150
        %v3186 = vadd.f32 %v3185, %v3151
        %v3187 = vadd.f32 %v3186, %v3152
        %v3188 = vadd.f32 %v3187, %v3153
        %v3189 = vadd.f32 %v3188, %v3154
        %v3190 = vadd.f32 %v3189, %v3155
        %v3191 = vadd.f32 %v3190, %v3156
        %v3192 = vadd.f32 %v3191, %v3157
        %v3193 = vadd.f32 %v3192, %v3158
        %v3194 = vadd.f32 %v3193, %v3159
        %v3195 = vadd.f32 %v3194, %v3160
        %v3196 = vadd.f32 %v3195, %v3161
        %v3197 = vadd.f32 %v3196, %v3162
        %v3198 = vrot.slane %v3197, 4
        %v3199 = vadd.f32 %v3197, %v3198
        %v3200 = vrot.slane %v3199, 2
        %v3201 = vadd.f32 %v3199, %v3200
        %v3202 = vrot.slane %v3201, 1
        %v3203 = vadd.f32 %v3201, %v3202
        %v3204 = vmul.f32 %v2875, %v2875
        %v3205 = vmul.f32 %v2876, %v2876
        %v3206 = vmul.f32 %v2877, %v2877
        %v3207 = vmul.f32 %v2878, %v2878
        %v3208 = vmul.f32 %v2879, %v2879
        %v3209 = vmul.f32 %v2880, %v2880
        %v3210 = vmul.f32 %v2881, %v2881
        %v3211 = vmul.f32 %v2882, %v2882
        %v3212 = vmul.f32 %v2883, %v2883
        %v3213 = vmul.f32 %v2884, %v2884
        %v3214 = vmul.f32 %v2885, %v2885
        %v3215 = vmul.f32 %v2886, %v2886
        %v3216 = vmul.f32 %v2887, %v2887
        %v3217 = vmul.f32 %v2888, %v2888
        %v3218 = vmul.f32 %v2889, %v2889
        %v3219 = vmul.f32 %v2890, %v2890
        %v3220 = vmul.f32 %v2891, %v2891
        %v3221 = vmul.f32 %v2892, %v2892
        %v3222 = vmul.f32 %v2893, %v2893
        %v3223 = vmul.f32 %v2894, %v2894
        %v3224 = vmul.f32 %v2895, %v2895
        %v3225 = vmul.f32 %v2896, %v2896
        %v3226 = vmul.f32 %v2897, %v2897
        %v3227 = vmul.f32 %v2898, %v2898
        %v3228 = vmul.f32 %v2899, %v2899
        %v3229 = vmul.f32 %v2900, %v2900
        %v3230 = vmul.f32 %v2901, %v2901
        %v3231 = vmul.f32 %v2902, %v2902
        %v3232 = vmul.f32 %v2903, %v2903
        %v3233 = vmul.f32 %v2904, %v2904
        %v3234 = vmul.f32 %v2905, %v2905
        %v3235 = vmul.f32 %v2906, %v2906
        %v3236 = vmul.f32 %v2907, %v2907
        %v3237 = vmul.f32 %v2908, %v2908
        %v3238 = vmul.f32 %v2909, %v2909
        %v3239 = vmul.f32 %v2910, %v2910
        %v3240 = vmul.f32 %v3204, %v2950
        %v3241 = vmul.f32 %v3205, %v2955
        %v3242 = vmul.f32 %v3206, %v2960
        %v3243 = vmul.f32 %v3207, %v2965
        %v3244 = vmul.f32 %v3208, %v2970
        %v3245 = vmul.f32 %v3209, %v2975
        %v3246 = vmul.f32 %v3210, %v2980
        %v3247 = vmul.f32 %v3211, %v2985
        %v3248 = vmul.f32 %v3212, %v2990
        %v3249 = vmul.f32 %v3213, %v2995
        %v3250 = vmul.f32 %v3214, %v3000
        %v3251 = vmul.f32 %v3215, %v3005
        %v3252 = vmul.f32 %v3216, %v3010
        %v3253 = vmul.f32 %v3217, %v3015
        %v3254 = vmul.f32 %v3218, %v3020
        %v3255 = vmul.f32 %v3219, %v3025
        %v3256 = vmul.f32 %v3220, %v3030
        %v3257 = vmul.f32 %v3221, %v3035
        %v3258 = vmul.f32 %v3222, %v3040
        %v3259 = vmul.f32 %v3223, %v3045
        %v3260 = vmul.f32 %v3224, %v3050
        %v3261 = vmul.f32 %v3225, %v3055
        %v3262 = vmul.f32 %v3226, %v3060
        %v3263 = vmul.f32 %v3227, %v3065
        %v3264 = vmul.f32 %v3228, %v3070
        %v3265 = vmul.f32 %v3229, %v3075
        %v3266 = vmul.f32 %v3230, %v3080
        %v3267 = vmul.f32 %v3231, %v3085
        %v3268 = vmul.f32 %v3232, %v3090
        %v3269 = vmul.f32 %v3233, %v3095
        %v3270 = vmul.f32 %v3234, %v3100
        %v3271 = vmul.f32 %v3235, %v3105
        %v3272 = vmul.f32 %v3236, %v3110
        %v3273 = vmul.f32 %v3237, %v3115
        %v3274 = vmul.f32 %v3238, %v3120
        %v3275 = vmul.f32 %v3239, %v3125
        %v3276 = vadd.f32 %v3240, %v3241
        %v3277 = vadd.f32 %v3276, %v3242
        %v3278 = vadd.f32 %v3277, %v3243
        %v3279 = vadd.f32 %v3278, %v3244
        %v3280 = vadd.f32 %v3279, %v3245
        %v3281 = vadd.f32 %v3280, %v3246
        %v3282 = vadd.f32 %v3281, %v3247
        %v3283 = vadd.f32 %v3282, %v3248
        %v3284 = vadd.f32 %v3283, %v3249
        %v3285 = vadd.f32 %v3284, %v3250
        %v3286 = vadd.f32 %v3285, %v3251
        %v3287 = vadd.f32 %v3286, %v3252
        %v3288 = vadd.f32 %v3287, %v3253
        %v3289 = vadd.f32 %v3288, %v3254
        %v3290 = vadd.f32 %v3289, %v3255
        %v3291 = vadd.f32 %v3290, %v3256
        %v3292 = vadd.f32 %v3291, %v3257
        %v3293 = vadd.f32 %v3292, %v3258
        %v3294 = vadd.f32 %v3293, %v3259
        %v3295 = vadd.f32 %v3294, %v3260
        %v3296 = vadd.f32 %v3295, %v3261
        %v3297 = vadd.f32 %v3296, %v3262
        %v3298 = vadd.f32 %v3297, %v3263
        %v3299 = vadd.f32 %v3298, %v3264
        %v3300 = vadd.f32 %v3299, %v3265
        %v3301 = vadd.f32 %v3300, %v3266
        %v3302 = vadd.f32 %v3301, %v3267
        %v3303 = vadd.f32 %v3302, %v3268
        %v3304 = vadd.f32 %v3303, %v3269
        %v3305 = vadd.f32 %v3304, %v3270
        %v3306 = vadd.f32 %v3305, %v3271
        %v3307 = vadd.f32 %v3306, %v3272
        %v3308 = vadd.f32 %v3307, %v3273
        %v3309 = vadd.f32 %v3308, %v3274
        %v3310 = vadd.f32 %v3309, %v3275
        %v3311 = vrot.slane %v3310, 4
        %v3312 = vadd.f32 %v3310, %v3311
        %v3313 = vrot.slane %v3312, 2
        %v3314 = vadd.f32 %v3312, %v3313
        %v3315 = vrot.slane %v3314, 1
        %v3316 = vadd.f32 %v3314, %v3315
        %vm3317 = vcmask 1040384
        %v3318 = vsel %vm3317, %v3203, %v3316
        %vm3319 = vcmask 1041408
        %v3320 = vsel %vm3319, %v3318, 0.0
        %3321 = vst [vmem:[%s190] sm:$0xff] %v3320
        %s3322 = sand.u32 %s112, 1
        %s3323 = scalar_lea.sflag [#allocation3], %s3322
        %s3324 = sand.u32 %s112, 1
        %s3325 = smul.addr %s3324, 8
        %s3326 = scalar_lea.vmem [#allocation2], %s3325
        // Predicated region
        $region33: #{tpu_custom_call.1} parent=31 // pred_check
          %p3327 = pneg %p122
        $region34: #{tpu_custom_call.1} parent=31 // pred_check_branch
          %3329 = sbr.rel (%p3327) target = $region36
        $region35: #{tpu_custom_call.1} parent=31 // pred_region
          %3331 = vsyncadd %s3323, 0
          %s3332 = sadd.s32 %s22, %s21
          %s3333 = smul.addr %s3332, 8
          %s3334 = scalar_lea.hbm %s3, %s3333
          %s3336 = sshll.u32 %s3326, 4
          %s3337 = int_to_ptr.vmem [resolvable:$true] %s3336
          %s3338 = sshll.u32 %s3334, 4
          %s3339 = int_to_ptr.hbm [resolvable:$true] %s3338
          %3341 = dma.vmem_to_hbm [thread:$0]  %s3337, 128, %s3339, %s3323
        $region36: #{tpu_custom_call.1} parent=31 // pred_fallthru
          _
      $region32: #{tpu_custom_call.1} parent=5 // pred_fallthru
        _
      %p3342 = scmp.le.s32.totalorder 2, %s12
      // Predicated region
      $region37: #{tpu_custom_call.1} parent=5 // pred_check
        %p3343 = pneg %p3342
      $region38: #{tpu_custom_call.1} parent=5 // pred_check_branch
        %3345 = sbr.rel (%p3343) target = $region40
      $region39: #{tpu_custom_call.1} parent=5 // pred_region
        %s3346 = ssub.s32 %s12, 2
        // Predicated region
        $region41: #{tpu_custom_call.1} parent=39 // pred_check
          %p3347 = pneg %p128
        $region42: #{tpu_custom_call.1} parent=39 // pred_check_branch
          %3349 = sbr.rel (%p3347) target = $region44
        $region43: #{tpu_custom_call.1} parent=39 // pred_region
          %s3350 = sand.u32 %s113, 1
          %s3351 = scalar_lea.sflag [#allocation3], %s3350
          %s3352 = sand.u32 %s113, 1
          %s3353 = smul.addr %s3352, 8
          %s3354 = scalar_lea.vmem [#allocation2], %s3353
          %3356 = dma.done %s3351, 128
        $region44: #{tpu_custom_call.1} parent=39 // pred_fallthru
          _
      $region40: #{tpu_custom_call.1} parent=5 // pred_fallthru
        _
    $region6: #{tpu_custom_call.1} parent=1 // loop_footer
      %s16 = sadd.s32 1, %s12
    $region7: #{tpu_custom_call.1} parent=1 // loop_footer_branch
      %11 = sbr.rel target = $region3
    $region8: #{tpu_custom_call.1} parent=1 // loop_exit
      _
    %3357 = vsyncpa [#allocation3], 1
    %s3358 = scalar_lea.sflag [#allocation3], 1
    %3359 = vsyncpa %s3358, 1

</llo_original>
